<compile_context>
chip_gen: v7x
topology: tpu7x:2x2x1
jax: 0.10.0
libtpu: 0.0.40
codegen_flags: <defaults>
</compile_context>

<pallas_src>
import jax
import jax.numpy as jnp
from jax.experimental import pallas as pl
from jax.experimental.pallas import tpu as pltpu

TAU = 0.2          # tau_tropical (learn_tau_tropical=False -> compile-time constant)
BN_EPS = 1e-5


def _up8(n):
    return -(-n // 8) * 8


def _up128(n):
    return -(-n // 128) * 128


def _pack_params(params, D, H1, H2, O, o_rows, pcols=128):
    """Pack all (transposed) parameters into one lane-padded f32 buffer.

    Every entry starts on an 8-aligned row so in-kernel static slices are tile-aligned.
    sigmoid(gate) / (1 - sigmoid(gate)) are folded directly into w1^T's columns.
    Layout (rows x 128):
      w1g^T (H1,2D) | [b1|s1|t1] (H1,3) | w2^T (H2,H1) | [b2|s2|t2] (H2,3)
      | w3^T zero-padded (o_rows,H2) | b3 (o_rows,1)
    """
    g = jax.nn.sigmoid(params["gate"])                          # (1, D)
    gate_cols = jnp.concatenate([g, 1.0 - g], axis=1)           # (1, 2D)
    w1g_t = (params["w1"] * gate_cols.T).T                      # (H1, 2D), gate folded in
    w3_pad = jnp.zeros((o_rows, H2), jnp.float32).at[:O, :].set(params["w3"].T)
    b3_pad = jnp.zeros((o_rows, 1), jnp.float32).at[:O, :].set(params["b3"].T)
    entries = [
        ("w1", w1g_t),                                                          # (H1, 2D)
        ("aff1", jnp.concatenate(
            [params["b1"].T, params["s1"].T, params["t1"].T], axis=1)),         # (H1, 3)
        ("w2", params["w2"].T),                                                 # (H2, H1)
        ("aff2", jnp.concatenate(
            [params["b2"].T, params["s2"].T, params["t2"].T], axis=1)),         # (H2, 3)
        ("w3", w3_pad),                                                         # (o_rows, H2)
        ("b3", b3_pad),                                                         # (o_rows, 1)
    ]
    offs, rows = {}, 0
    for name, arr in entries:
        offs[name] = rows
        rows += _up8(arr.shape[0])
    buf = jnp.zeros((rows, pcols), jnp.float32)
    for name, arr in entries:
        buf = buf.at[offs[name]:offs[name] + arr.shape[0], :arr.shape[1]].set(arr)
    return buf, offs


def _make_kernel(N, D, H1, H2, offs):
    rw1, ra1 = offs["w1"], offs["aff1"]
    rw2, ra2 = offs["w2"], offs["aff2"]
    rw3, rb3 = offs["w3"], offs["b3"]
    inv_tau = 1.0 / TAU
    inv_pairs = 2.0 / (N * N)

    def kernel(x_ref, p_ref, o_ref):
        # ------------- GatedTropicalDifferenceAggregator (streamed over N) -------------
        # Pass 1: running max/min + sum_{i<j} |x_i - x_j| into one (D, TB) accumulator.
        # No (N, N, D, TB) intermediate is ever materialized; rows are streamed from VMEM.
        x0 = x_ref[0]                                    # (D, TB) f32, lane-dense
        xmax = x0
        xmin = x0
        pair_acc = jnp.zeros_like(x0)
        for j in range(1, N):
            xj = x_ref[j]
            xmax = jnp.maximum(xmax, xj)
            xmin = jnp.minimum(xmin, xj)
            for i in range(j):
                pair_acc = pair_acc + jnp.abs(x_ref[i] - xj)
        mean_abs = pair_acc * inv_pairs                  # mean over all (i, j) incl. i==j

        # Pass 2: stabilized smooth (tropical) max / min over the set axis.
        se_hi = jnp.zeros_like(x0)
        se_lo = jnp.zeros_like(x0)
        for i in range(N):
            xi = x_ref[i]
            se_hi = se_hi + jnp.exp((xi - xmax) * inv_tau)
            se_lo = se_lo + jnp.exp((xmin - xi) * inv_tau)
        # trop = smooth_max - smooth_min
        trop = (xmax - xmin) + TAU * (jnp.log(se_hi) + jnp.log(se_lo))

        # Gating g / (1-g) is folded into w1's columns (wrapper); just stack features
        # along the sublane axis -> (2D, TB), a free vreg-level concat (D % 8 == 0).
        feat = jnp.concatenate([trop, mean_abs], axis=0)

        # ------------------------------ MLP (eval mode) --------------------------------
        # layer 1: single MXU matmul, ReLU, folded BatchNorm affine
        h = (jnp.dot(p_ref[rw1:rw1 + H1, 0:2 * D], feat,
                     preferred_element_type=jnp.float32)
             + p_ref[ra1:ra1 + H1, 0:1])                                     # (H1, TB)
        h = jnp.maximum(h, 0.0) * p_ref[ra1:ra1 + H1, 1:2] + p_ref[ra1:ra1 + H1, 2:3]

        # layer 2
        h = (jnp.dot(p_ref[rw2:rw2 + H2, 0:H1], h,
                     preferred_element_type=jnp.float32)
             + p_ref[ra2:ra2 + H2, 0:1])                                     # (H2, TB)
        h = jnp.maximum(h, 0.0) * p_ref[ra2:ra2 + H2, 1:2] + p_ref[ra2:ra2 + H2, 2:3]

        # output head (rows padded to a sublane multiple; padded rows are zero)
        o_rows = o_ref.shape[0]
        o_ref[...] = (jnp.dot(p_ref[rw3:rw3 + o_rows, 0:H2], h,
                              preferred_element_type=jnp.float32)
                      + p_ref[rb3:rb3 + o_rows, 0:1])    # (o_rows, TB) unmasked store

    return kernel


def gated_tropical_difference_net_tl(x_t, params, *, block_b=512):
    """Kernel-native entry: x_t (N, D, B) f32 -> (O, B) f32 (no layout plumbing)."""
    N, D, B = x_t.shape
    H1 = params["w1"].shape[1]
    H2 = params["w2"].shape[1]
    O = params["w3"].shape[1]
    o_rows = _up8(O)
    assert max(2 * D, H1, H2, O) <= 128, "packed-parameter layout assumes dims <= 128"

    # Batch tile: multiple of 128 on the lane axis.  Keep at least 2 grid steps whenever
    # B allows it ("parallel" batch axis shards across v7x's 2 TensorCores; never grid=1).
    tb = max(128, (int(block_b) // 128) * 128)
    tb = min(tb, max(128, _up128(-(-B // 2))))
    b_pad = -(-B // tb) * tb
    if b_pad != B:
        x_t = jnp.pad(x_t, ((0, 0), (0, 0), (0, b_pad - B)))

    pbuf, offs = _pack_params(params, D, H1, H2, O, o_rows)
    kernel = _make_kernel(N, D, H1, H2, offs)

    out_t = pl.pallas_call(
        kernel,
        grid=(b_pad // tb,),
        in_specs=[
            pl.BlockSpec((N, D, tb), lambda i: (0, 0, i)),        # x^T batch tiles
            pl.BlockSpec(pbuf.shape, lambda i: (0, 0)),           # params: resident DMA
        ],
        out_specs=pl.BlockSpec((o_rows, tb), lambda i: (0, i)),   # lane-dense store
        out_shape=jax.ShapeDtypeStruct((o_rows, b_pad), jnp.float32),
        compiler_params=pltpu.CompilerParams(
            dimension_semantics=("parallel",)),                   # shards v7x's 2 TCs
    )(x_t, pbuf)

    return out_t[:O, :B]                                          # (O, B)


def gated_tropical_difference_net(x, params, *, block_b=512):
    """Module-contract wrapper. x: (B, N, D) f32 -> (B, O) f32.

    The moveaxis / final transpose are pure layout plumbing; keep activations in
    (N, D, B) upstream and call gated_tropical_difference_net_tl to avoid them.
    """
    x_t = jnp.moveaxis(x, 0, -1)                                  # (N, D, B)
    return gated_tropical_difference_net_tl(x_t, params, block_b=block_b).T


def init_params(key, input_dim, output_dim, hidden_dims=(32, 16)):
    """Deterministic synthetic parameters (shapes match the PyTorch module)."""
    ks = jax.random.split(key, 16)
    D = input_dim
    H1, H2 = hidden_dims

    def lin(kw, kb, fan_in, fan_out):
        lim = 1.0 / jnp.sqrt(fan_in)
        w = jax.random.uniform(kw, (fan_in, fan_out), jnp.float32, -lim, lim)
        b = jax.random.uniform(kb, (1, fan_out), jnp.float32, -lim, lim)
        return w, b

    def bn_folded(kg, kb, km, kv, n):
        gamma = jax.random.uniform(kg, (1, n), jnp.float32, 0.5, 1.5)
        beta = 0.1 * jax.random.normal(kb, (1, n), jnp.float32)
        r_mean = 0.1 * jax.random.normal(km, (1, n), jnp.float32)
        r_var = jax.random.uniform(kv, (1, n), jnp.float32, 0.5, 1.5)
        scale = gamma / jnp.sqrt(r_var + BN_EPS)
        shift = beta - r_mean * scale
        return scale, shift

    gate = 0.5 * jax.random.normal(ks[0], (1, D), jnp.float32)
    w1, b1 = lin(ks[1], ks[2], 2 * D, H1)
    s1, t1 = bn_folded(ks[3], ks[4], ks[5], ks[6], H1)
    w2, b2 = lin(ks[7], ks[8], H1, H2)
    s2, t2 = bn_folded(ks[9], ks[10], ks[11], ks[12], H2)
    w3, b3 = lin(ks[13], ks[14], H2, output_dim)

    return dict(gate=gate, w1=w1, b1=b1, s1=s1, t1=t1,
                w2=w2, b2=b2, s2=s2, t2=t2, w3=w3, b3=b3)


def _reference(x, p):
    """Pure-JAX reference of the same forward pass (correctness check)."""
    smax = TAU * jax.nn.logsumexp(x / TAU, axis=1)
    smin = -TAU * jax.nn.logsumexp(-x / TAU, axis=1)
    trop = smax - smin
    diff = jnp.abs(x[:, :, None, :] - x[:, None, :, :])
    mean_abs = jnp.mean(diff, axis=(1, 2))
    g = jax.nn.sigmoid(p["gate"])
    feat = jnp.concatenate([g * trop, (1.0 - g) * mean_abs], axis=-1)
    h = jax.nn.relu(feat @ p["w1"] + p["b1"]) * p["s1"] + p["t1"]
    h = jax.nn.relu(h @ p["w2"] + p["b2"]) * p["s2"] + p["t2"]
    return h @ p["w3"] + p["b3"]


if __name__ == "__main__":
    # Small per-row problem (N=8 set elements of dim D=16, hidden=(32,16), O=4), batch
    # large enough (still ~1 MiB of input) that the kernel pipelines over 4 grid tiles
    # at the new 512-lane tile (>= 2 steps per v7x TensorCore).
    B, N, D, O = 2048, 8, 16, 4

    key = jax.random.PRNGKey(0)
    k_x, k_p = jax.random.split(key)
    x = jax.random.normal(k_x, (B, N, D), jnp.float32)
    params = init_params(k_p, input_dim=D, output_dim=O, hidden_dims=(32, 16))

    out = gated_tropical_difference_net(x, params, block_b=512)
    out = jax.block_until_ready(out)

    ref = _reference(x, params)
    assert out.shape == (B, O)
    assert jnp.allclose(out, ref, atol=1e-3, rtol=1e-3), (
        "max abs err = %f" % float(jnp.max(jnp.abs(out - ref))))

    print("KERNEL_OK")
</pallas_src>

<mosaic_0001>
module attributes {stable_mosaic.version = 11 : i64} {
  func.func @kernel(%arg0: i32, %arg1: memref<8x16x512xf32, #tpu.memory_space<vmem>>, %arg2: memref<112x128xf32, #tpu.memory_space<vmem>>, %arg3: memref<8x512xf32, #tpu.memory_space<vmem>>) attributes {dimension_semantics = [#tpu.dimension_semantics<parallel>], iteration_bounds = array<i64: 4>, scalar_prefetch = 0 : i64, scratch_operands = 0 : i64, tpu.core_type = #tpu.core_type<tc>, window_params = [{transform_indices = @transform_0, window_bounds = array<i64: 8, 16, 512>}, {pipeline_mode = #tpu.pipeline_mode<synchronous>, transform_indices = @transform_1, window_bounds = array<i64: 112, 128>}, {transform_indices = @transform_2, window_bounds = array<i64: 8, 512>}]} {
    %c0 = arith.constant 0 : index
    %c0_0 = arith.constant 0 : index
    %c0_1 = arith.constant 0 : index
    %0 = vector.load %arg1[%c0, %c0_0, %c0_1] : memref<8x16x512xf32, #tpu.memory_space<vmem>>, vector<1x16x512xf32>
    %1 = vector.shape_cast %0 : vector<1x16x512xf32> to vector<16x512xf32>
    %cst = arith.constant 0.000000e+00 : f32
    %2 = vector.broadcast %cst : f32 to vector<16x512xf32>
    %c1 = arith.constant 1 : index
    %c0_2 = arith.constant 0 : index
    %c0_3 = arith.constant 0 : index
    %3 = vector.load %arg1[%c1, %c0_2, %c0_3] : memref<8x16x512xf32, #tpu.memory_space<vmem>>, vector<1x16x512xf32>
    %4 = vector.shape_cast %3 : vector<1x16x512xf32> to vector<16x512xf32>
    %5 = arith.maximumf %1, %4 : vector<16x512xf32>
    %6 = arith.minimumf %1, %4 : vector<16x512xf32>
    %c0_4 = arith.constant 0 : index
    %c0_5 = arith.constant 0 : index
    %c0_6 = arith.constant 0 : index
    %7 = vector.load %arg1[%c0_4, %c0_5, %c0_6] : memref<8x16x512xf32, #tpu.memory_space<vmem>>, vector<1x16x512xf32>
    %8 = vector.shape_cast %7 : vector<1x16x512xf32> to vector<16x512xf32>
    %9 = arith.subf %8, %4 : vector<16x512xf32>
    %10 = math.absf %9 : vector<16x512xf32>
    %11 = arith.addf %2, %10 : vector<16x512xf32>
    %c2 = arith.constant 2 : index
    %c0_7 = arith.constant 0 : index
    %c0_8 = arith.constant 0 : index
    %12 = vector.load %arg1[%c2, %c0_7, %c0_8] : memref<8x16x512xf32, #tpu.memory_space<vmem>>, vector<1x16x512xf32>
    %13 = vector.shape_cast %12 : vector<1x16x512xf32> to vector<16x512xf32>
    %14 = arith.maximumf %5, %13 : vector<16x512xf32>
    %15 = arith.minimumf %6, %13 : vector<16x512xf32>
    %c0_9 = arith.constant 0 : index
    %c0_10 = arith.constant 0 : index
    %c0_11 = arith.constant 0 : index
    %16 = vector.load %arg1[%c0_9, %c0_10, %c0_11] : memref<8x16x512xf32, #tpu.memory_space<vmem>>, vector<1x16x512xf32>
    %17 = vector.shape_cast %16 : vector<1x16x512xf32> to vector<16x512xf32>
    %18 = arith.subf %17, %13 : vector<16x512xf32>
    %19 = math.absf %18 : vector<16x512xf32>
    %20 = arith.addf %11, %19 : vector<16x512xf32>
    %c1_12 = arith.constant 1 : index
    %c0_13 = arith.constant 0 : index
    %c0_14 = arith.constant 0 : index
    %21 = vector.load %arg1[%c1_12, %c0_13, %c0_14] : memref<8x16x512xf32, #tpu.memory_space<vmem>>, vector<1x16x512xf32>
    %22 = vector.shape_cast %21 : vector<1x16x512xf32> to vector<16x512xf32>
    %23 = arith.subf %22, %13 : vector<16x512xf32>
    %24 = math.absf %23 : vector<16x512xf32>
    %25 = arith.addf %20, %24 : vector<16x512xf32>
    %c3 = arith.constant 3 : index
    %c0_15 = arith.constant 0 : index
    %c0_16 = arith.constant 0 : index
    %26 = vector.load %arg1[%c3, %c0_15, %c0_16] : memref<8x16x512xf32, #tpu.memory_space<vmem>>, vector<1x16x512xf32>
    %27 = vector.shape_cast %26 : vector<1x16x512xf32> to vector<16x512xf32>
    %28 = arith.maximumf %14, %27 : vector<16x512xf32>
    %29 = arith.minimumf %15, %27 : vector<16x512xf32>
    %c0_17 = arith.constant 0 : index
    %c0_18 = arith.constant 0 : index
    %c0_19 = arith.constant 0 : index
    %30 = vector.load %arg1[%c0_17, %c0_18, %c0_19] : memref<8x16x512xf32, #tpu.memory_space<vmem>>, vector<1x16x512xf32>
    %31 = vector.shape_cast %30 : vector<1x16x512xf32> to vector<16x512xf32>
    %32 = arith.subf %31, %27 : vector<16x512xf32>
    %33 = math.absf %32 : vector<16x512xf32>
    %34 = arith.addf %25, %33 : vector<16x512xf32>
    %c1_20 = arith.constant 1 : index
    %c0_21 = arith.constant 0 : index
    %c0_22 = arith.constant 0 : index
    %35 = vector.load %arg1[%c1_20, %c0_21, %c0_22] : memref<8x16x512xf32, #tpu.memory_space<vmem>>, vector<1x16x512xf32>
    %36 = vector.shape_cast %35 : vector<1x16x512xf32> to vector<16x512xf32>
    %37 = arith.subf %36, %27 : vector<16x512xf32>
    %38 = math.absf %37 : vector<16x512xf32>
    %39 = arith.addf %34, %38 : vector<16x512xf32>
    %c2_23 = arith.constant 2 : index
    %c0_24 = arith.constant 0 : index
    %c0_25 = arith.constant 0 : index
    %40 = vector.load %arg1[%c2_23, %c0_24, %c0_25] : memref<8x16x512xf32, #tpu.memory_space<vmem>>, vector<1x16x512xf32>
    %41 = vector.shape_cast %40 : vector<1x16x512xf32> to vector<16x512xf32>
    %42 = arith.subf %41, %27 : vector<16x512xf32>
    %43 = math.absf %42 : vector<16x512xf32>
    %44 = arith.addf %39, %43 : vector<16x512xf32>
    %c4 = arith.constant 4 : index
    %c0_26 = arith.constant 0 : index
    %c0_27 = arith.constant 0 : index
    %45 = vector.load %arg1[%c4, %c0_26, %c0_27] : memref<8x16x512xf32, #tpu.memory_space<vmem>>, vector<1x16x512xf32>
    %46 = vector.shape_cast %45 : vector<1x16x512xf32> to vector<16x512xf32>
    %47 = arith.maximumf %28, %46 : vector<16x512xf32>
    %48 = arith.minimumf %29, %46 : vector<16x512xf32>
    %c0_28 = arith.constant 0 : index
    %c0_29 = arith.constant 0 : index
    %c0_30 = arith.constant 0 : index
    %49 = vector.load %arg1[%c0_28, %c0_29, %c0_30] : memref<8x16x512xf32, #tpu.memory_space<vmem>>, vector<1x16x512xf32>
    %50 = vector.shape_cast %49 : vector<1x16x512xf32> to vector<16x512xf32>
    %51 = arith.subf %50, %46 : vector<16x512xf32>
    %52 = math.absf %51 : vector<16x512xf32>
    %53 = arith.addf %44, %52 : vector<16x512xf32>
    %c1_31 = arith.constant 1 : index
    %c0_32 = arith.constant 0 : index
    %c0_33 = arith.constant 0 : index
    %54 = vector.load %arg1[%c1_31, %c0_32, %c0_33] : memref<8x16x512xf32, #tpu.memory_space<vmem>>, vector<1x16x512xf32>
    %55 = vector.shape_cast %54 : vector<1x16x512xf32> to vector<16x512xf32>
    %56 = arith.subf %55, %46 : vector<16x512xf32>
    %57 = math.absf %56 : vector<16x512xf32>
    %58 = arith.addf %53, %57 : vector<16x512xf32>
    %c2_34 = arith.constant 2 : index
    %c0_35 = arith.constant 0 : index
    %c0_36 = arith.constant 0 : index
    %59 = vector.load %arg1[%c2_34, %c0_35, %c0_36] : memref<8x16x512xf32, #tpu.memory_space<vmem>>, vector<1x16x512xf32>
    %60 = vector.shape_cast %59 : vector<1x16x512xf32> to vector<16x512xf32>
    %61 = arith.subf %60, %46 : vector<16x512xf32>
    %62 = math.absf %61 : vector<16x512xf32>
    %63 = arith.addf %58, %62 : vector<16x512xf32>
    %c3_37 = arith.constant 3 : index
    %c0_38 = arith.constant 0 : index
    %c0_39 = arith.constant 0 : index
    %64 = vector.load %arg1[%c3_37, %c0_38, %c0_39] : memref<8x16x512xf32, #tpu.memory_space<vmem>>, vector<1x16x512xf32>
    %65 = vector.shape_cast %64 : vector<1x16x512xf32> to vector<16x512xf32>
    %66 = arith.subf %65, %46 : vector<16x512xf32>
    %67 = math.absf %66 : vector<16x512xf32>
    %68 = arith.addf %63, %67 : vector<16x512xf32>
    %c5 = arith.constant 5 : index
    %c0_40 = arith.constant 0 : index
    %c0_41 = arith.constant 0 : index
    %69 = vector.load %arg1[%c5, %c0_40, %c0_41] : memref<8x16x512xf32, #tpu.memory_space<vmem>>, vector<1x16x512xf32>
    %70 = vector.shape_cast %69 : vector<1x16x512xf32> to vector<16x512xf32>
    %71 = arith.maximumf %47, %70 : vector<16x512xf32>
    %72 = arith.minimumf %48, %70 : vector<16x512xf32>
    %c0_42 = arith.constant 0 : index
    %c0_43 = arith.constant 0 : index
    %c0_44 = arith.constant 0 : index
    %73 = vector.load %arg1[%c0_42, %c0_43, %c0_44] : memref<8x16x512xf32, #tpu.memory_space<vmem>>, vector<1x16x512xf32>
    %74 = vector.shape_cast %73 : vector<1x16x512xf32> to vector<16x512xf32>
    %75 = arith.subf %74, %70 : vector<16x512xf32>
    %76 = math.absf %75 : vector<16x512xf32>
    %77 = arith.addf %68, %76 : vector<16x512xf32>
    %c1_45 = arith.constant 1 : index
    %c0_46 = arith.constant 0 : index
    %c0_47 = arith.constant 0 : index
    %78 = vector.load %arg1[%c1_45, %c0_46, %c0_47] : memref<8x16x512xf32, #tpu.memory_space<vmem>>, vector<1x16x512xf32>
    %79 = vector.shape_cast %78 : vector<1x16x512xf32> to vector<16x512xf32>
    %80 = arith.subf %79, %70 : vector<16x512xf32>
    %81 = math.absf %80 : vector<16x512xf32>
    %82 = arith.addf %77, %81 : vector<16x512xf32>
    %c2_48 = arith.constant 2 : index
    %c0_49 = arith.constant 0 : index
    %c0_50 = arith.constant 0 : index
    %83 = vector.load %arg1[%c2_48, %c0_49, %c0_50] : memref<8x16x512xf32, #tpu.memory_space<vmem>>, vector<1x16x512xf32>
    %84 = vector.shape_cast %83 : vector<1x16x512xf32> to vector<16x512xf32>
    %85 = arith.subf %84, %70 : vector<16x512xf32>
    %86 = math.absf %85 : vector<16x512xf32>
    %87 = arith.addf %82, %86 : vector<16x512xf32>
    %c3_51 = arith.constant 3 : index
    %c0_52 = arith.constant 0 : index
    %c0_53 = arith.constant 0 : index
    %88 = vector.load %arg1[%c3_51, %c0_52, %c0_53] : memref<8x16x512xf32, #tpu.memory_space<vmem>>, vector<1x16x512xf32>
    %89 = vector.shape_cast %88 : vector<1x16x512xf32> to vector<16x512xf32>
    %90 = arith.subf %89, %70 : vector<16x512xf32>
    %91 = math.absf %90 : vector<16x512xf32>
    %92 = arith.addf %87, %91 : vector<16x512xf32>
    %c4_54 = arith.constant 4 : index
    %c0_55 = arith.constant 0 : index
    %c0_56 = arith.constant 0 : index
    %93 = vector.load %arg1[%c4_54, %c0_55, %c0_56] : memref<8x16x512xf32, #tpu.memory_space<vmem>>, vector<1x16x512xf32>
    %94 = vector.shape_cast %93 : vector<1x16x512xf32> to vector<16x512xf32>
    %95 = arith.subf %94, %70 : vector<16x512xf32>
    %96 = math.absf %95 : vector<16x512xf32>
    %97 = arith.addf %92, %96 : vector<16x512xf32>
    %c6 = arith.constant 6 : index
    %c0_57 = arith.constant 0 : index
    %c0_58 = arith.constant 0 : index
    %98 = vector.load %arg1[%c6, %c0_57, %c0_58] : memref<8x16x512xf32, #tpu.memory_space<vmem>>, vector<1x16x512xf32>
    %99 = vector.shape_cast %98 : vector<1x16x512xf32> to vector<16x512xf32>
    %100 = arith.maximumf %71, %99 : vector<16x512xf32>
    %101 = arith.minimumf %72, %99 : vector<16x512xf32>
    %c0_59 = arith.constant 0 : index
    %c0_60 = arith.constant 0 : index
    %c0_61 = arith.constant 0 : index
    %102 = vector.load %arg1[%c0_59, %c0_60, %c0_61] : memref<8x16x512xf32, #tpu.memory_space<vmem>>, vector<1x16x512xf32>
    %103 = vector.shape_cast %102 : vector<1x16x512xf32> to vector<16x512xf32>
    %104 = arith.subf %103, %99 : vector<16x512xf32>
    %105 = math.absf %104 : vector<16x512xf32>
    %106 = arith.addf %97, %105 : vector<16x512xf32>
    %c1_62 = arith.constant 1 : index
    %c0_63 = arith.constant 0 : index
    %c0_64 = arith.constant 0 : index
    %107 = vector.load %arg1[%c1_62, %c0_63, %c0_64] : memref<8x16x512xf32, #tpu.memory_space<vmem>>, vector<1x16x512xf32>
    %108 = vector.shape_cast %107 : vector<1x16x512xf32> to vector<16x512xf32>
    %109 = arith.subf %108, %99 : vector<16x512xf32>
    %110 = math.absf %109 : vector<16x512xf32>
    %111 = arith.addf %106, %110 : vector<16x512xf32>
    %c2_65 = arith.constant 2 : index
    %c0_66 = arith.constant 0 : index
    %c0_67 = arith.constant 0 : index
    %112 = vector.load %arg1[%c2_65, %c0_66, %c0_67] : memref<8x16x512xf32, #tpu.memory_space<vmem>>, vector<1x16x512xf32>
    %113 = vector.shape_cast %112 : vector<1x16x512xf32> to vector<16x512xf32>
    %114 = arith.subf %113, %99 : vector<16x512xf32>
    %115 = math.absf %114 : vector<16x512xf32>
    %116 = arith.addf %111, %115 : vector<16x512xf32>
    %c3_68 = arith.constant 3 : index
    %c0_69 = arith.constant 0 : index
    %c0_70 = arith.constant 0 : index
    %117 = vector.load %arg1[%c3_68, %c0_69, %c0_70] : memref<8x16x512xf32, #tpu.memory_space<vmem>>, vector<1x16x512xf32>
    %118 = vector.shape_cast %117 : vector<1x16x512xf32> to vector<16x512xf32>
    %119 = arith.subf %118, %99 : vector<16x512xf32>
    %120 = math.absf %119 : vector<16x512xf32>
    %121 = arith.addf %116, %120 : vector<16x512xf32>
    %c4_71 = arith.constant 4 : index
    %c0_72 = arith.constant 0 : index
    %c0_73 = arith.constant 0 : index
    %122 = vector.load %arg1[%c4_71, %c0_72, %c0_73] : memref<8x16x512xf32, #tpu.memory_space<vmem>>, vector<1x16x512xf32>
    %123 = vector.shape_cast %122 : vector<1x16x512xf32> to vector<16x512xf32>
    %124 = arith.subf %123, %99 : vector<16x512xf32>
    %125 = math.absf %124 : vector<16x512xf32>
    %126 = arith.addf %121, %125 : vector<16x512xf32>
    %c5_74 = arith.constant 5 : index
    %c0_75 = arith.constant 0 : index
    %c0_76 = arith.constant 0 : index
    %127 = vector.load %arg1[%c5_74, %c0_75, %c0_76] : memref<8x16x512xf32, #tpu.memory_space<vmem>>, vector<1x16x512xf32>
    %128 = vector.shape_cast %127 : vector<1x16x512xf32> to vector<16x512xf32>
    %129 = arith.subf %128, %99 : vector<16x512xf32>
    %130 = math.absf %129 : vector<16x512xf32>
    %131 = arith.addf %126, %130 : vector<16x512xf32>
    %c7 = arith.constant 7 : index
    %c0_77 = arith.constant 0 : index
    %c0_78 = arith.constant 0 : index
    %132 = vector.load %arg1[%c7, %c0_77, %c0_78] : memref<8x16x512xf32, #tpu.memory_space<vmem>>, vector<1x16x512xf32>
    %133 = vector.shape_cast %132 : vector<1x16x512xf32> to vector<16x512xf32>
    %134 = arith.maximumf %100, %133 : vector<16x512xf32>
    %135 = arith.minimumf %101, %133 : vector<16x512xf32>
    %c0_79 = arith.constant 0 : index
    %c0_80 = arith.constant 0 : index
    %c0_81 = arith.constant 0 : index
    %136 = vector.load %arg1[%c0_79, %c0_80, %c0_81] : memref<8x16x512xf32, #tpu.memory_space<vmem>>, vector<1x16x512xf32>
    %137 = vector.shape_cast %136 : vector<1x16x512xf32> to vector<16x512xf32>
    %138 = arith.subf %137, %133 : vector<16x512xf32>
    %139 = math.absf %138 : vector<16x512xf32>
    %140 = arith.addf %131, %139 : vector<16x512xf32>
    %c1_82 = arith.constant 1 : index
    %c0_83 = arith.constant 0 : index
    %c0_84 = arith.constant 0 : index
    %141 = vector.load %arg1[%c1_82, %c0_83, %c0_84] : memref<8x16x512xf32, #tpu.memory_space<vmem>>, vector<1x16x512xf32>
    %142 = vector.shape_cast %141 : vector<1x16x512xf32> to vector<16x512xf32>
    %143 = arith.subf %142, %133 : vector<16x512xf32>
    %144 = math.absf %143 : vector<16x512xf32>
    %145 = arith.addf %140, %144 : vector<16x512xf32>
    %c2_85 = arith.constant 2 : index
    %c0_86 = arith.constant 0 : index
    %c0_87 = arith.constant 0 : index
    %146 = vector.load %arg1[%c2_85, %c0_86, %c0_87] : memref<8x16x512xf32, #tpu.memory_space<vmem>>, vector<1x16x512xf32>
    %147 = vector.shape_cast %146 : vector<1x16x512xf32> to vector<16x512xf32>
    %148 = arith.subf %147, %133 : vector<16x512xf32>
    %149 = math.absf %148 : vector<16x512xf32>
    %150 = arith.addf %145, %149 : vector<16x512xf32>
    %c3_88 = arith.constant 3 : index
    %c0_89 = arith.constant 0 : index
    %c0_90 = arith.constant 0 : index
    %151 = vector.load %arg1[%c3_88, %c0_89, %c0_90] : memref<8x16x512xf32, #tpu.memory_space<vmem>>, vector<1x16x512xf32>
    %152 = vector.shape_cast %151 : vector<1x16x512xf32> to vector<16x512xf32>
    %153 = arith.subf %152, %133 : vector<16x512xf32>
    %154 = math.absf %153 : vector<16x512xf32>
    %155 = arith.addf %150, %154 : vector<16x512xf32>
    %c4_91 = arith.constant 4 : index
    %c0_92 = arith.constant 0 : index
    %c0_93 = arith.constant 0 : index
    %156 = vector.load %arg1[%c4_91, %c0_92, %c0_93] : memref<8x16x512xf32, #tpu.memory_space<vmem>>, vector<1x16x512xf32>
    %157 = vector.shape_cast %156 : vector<1x16x512xf32> to vector<16x512xf32>
    %158 = arith.subf %157, %133 : vector<16x512xf32>
    %159 = math.absf %158 : vector<16x512xf32>
    %160 = arith.addf %155, %159 : vector<16x512xf32>
    %c5_94 = arith.constant 5 : index
    %c0_95 = arith.constant 0 : index
    %c0_96 = arith.constant 0 : index
    %161 = vector.load %arg1[%c5_94, %c0_95, %c0_96] : memref<8x16x512xf32, #tpu.memory_space<vmem>>, vector<1x16x512xf32>
    %162 = vector.shape_cast %161 : vector<1x16x512xf32> to vector<16x512xf32>
    %163 = arith.subf %162, %133 : vector<16x512xf32>
    %164 = math.absf %163 : vector<16x512xf32>
    %165 = arith.addf %160, %164 : vector<16x512xf32>
    %c6_97 = arith.constant 6 : index
    %c0_98 = arith.constant 0 : index
    %c0_99 = arith.constant 0 : index
    %166 = vector.load %arg1[%c6_97, %c0_98, %c0_99] : memref<8x16x512xf32, #tpu.memory_space<vmem>>, vector<1x16x512xf32>
    %167 = vector.shape_cast %166 : vector<1x16x512xf32> to vector<16x512xf32>
    %168 = arith.subf %167, %133 : vector<16x512xf32>
    %169 = math.absf %168 : vector<16x512xf32>
    %170 = arith.addf %165, %169 : vector<16x512xf32>
    %cst_100 = arith.constant 3.125000e-02 : f32
    %171 = vector.broadcast %cst_100 : f32 to vector<16x512xf32>
    %172 = arith.mulf %170, %171 : vector<16x512xf32>
    %cst_101 = arith.constant 0.000000e+00 : f32
    %173 = vector.broadcast %cst_101 : f32 to vector<16x512xf32>
    %cst_102 = arith.constant 0.000000e+00 : f32
    %174 = vector.broadcast %cst_102 : f32 to vector<16x512xf32>
    %c0_103 = arith.constant 0 : index
    %c0_104 = arith.constant 0 : index
    %c0_105 = arith.constant 0 : index
    %175 = vector.load %arg1[%c0_103, %c0_104, %c0_105] : memref<8x16x512xf32, #tpu.memory_space<vmem>>, vector<1x16x512xf32>
    %176 = vector.shape_cast %175 : vector<1x16x512xf32> to vector<16x512xf32>
    %177 = arith.subf %176, %134 : vector<16x512xf32>
    %cst_106 = arith.constant 5.000000e+00 : f32
    %178 = vector.broadcast %cst_106 : f32 to vector<16x512xf32>
    %179 = arith.mulf %177, %178 : vector<16x512xf32>
    %180 = math.exp %179 : vector<16x512xf32>
    %181 = arith.addf %173, %180 : vector<16x512xf32>
    %182 = arith.subf %135, %176 : vector<16x512xf32>
    %cst_107 = arith.constant 5.000000e+00 : f32
    %183 = vector.broadcast %cst_107 : f32 to vector<16x512xf32>
    %184 = arith.mulf %182, %183 : vector<16x512xf32>
    %185 = math.exp %184 : vector<16x512xf32>
    %186 = arith.addf %174, %185 : vector<16x512xf32>
    %c1_108 = arith.constant 1 : index
    %c0_109 = arith.constant 0 : index
    %c0_110 = arith.constant 0 : index
    %187 = vector.load %arg1[%c1_108, %c0_109, %c0_110] : memref<8x16x512xf32, #tpu.memory_space<vmem>>, vector<1x16x512xf32>
    %188 = vector.shape_cast %187 : vector<1x16x512xf32> to vector<16x512xf32>
    %189 = arith.subf %188, %134 : vector<16x512xf32>
    %cst_111 = arith.constant 5.000000e+00 : f32
    %190 = vector.broadcast %cst_111 : f32 to vector<16x512xf32>
    %191 = arith.mulf %189, %190 : vector<16x512xf32>
    %192 = math.exp %191 : vector<16x512xf32>
    %193 = arith.addf %181, %192 : vector<16x512xf32>
    %194 = arith.subf %135, %188 : vector<16x512xf32>
    %cst_112 = arith.constant 5.000000e+00 : f32
    %195 = vector.broadcast %cst_112 : f32 to vector<16x512xf32>
    %196 = arith.mulf %194, %195 : vector<16x512xf32>
    %197 = math.exp %196 : vector<16x512xf32>
    %198 = arith.addf %186, %197 : vector<16x512xf32>
    %c2_113 = arith.constant 2 : index
    %c0_114 = arith.constant 0 : index
    %c0_115 = arith.constant 0 : index
    %199 = vector.load %arg1[%c2_113, %c0_114, %c0_115] : memref<8x16x512xf32, #tpu.memory_space<vmem>>, vector<1x16x512xf32>
    %200 = vector.shape_cast %199 : vector<1x16x512xf32> to vector<16x512xf32>
    %201 = arith.subf %200, %134 : vector<16x512xf32>
    %cst_116 = arith.constant 5.000000e+00 : f32
    %202 = vector.broadcast %cst_116 : f32 to vector<16x512xf32>
    %203 = arith.mulf %201, %202 : vector<16x512xf32>
    %204 = math.exp %203 : vector<16x512xf32>
    %205 = arith.addf %193, %204 : vector<16x512xf32>
    %206 = arith.subf %135, %200 : vector<16x512xf32>
    %cst_117 = arith.constant 5.000000e+00 : f32
    %207 = vector.broadcast %cst_117 : f32 to vector<16x512xf32>
    %208 = arith.mulf %206, %207 : vector<16x512xf32>
    %209 = math.exp %208 : vector<16x512xf32>
    %210 = arith.addf %198, %209 : vector<16x512xf32>
    %c3_118 = arith.constant 3 : index
    %c0_119 = arith.constant 0 : index
    %c0_120 = arith.constant 0 : index
    %211 = vector.load %arg1[%c3_118, %c0_119, %c0_120] : memref<8x16x512xf32, #tpu.memory_space<vmem>>, vector<1x16x512xf32>
    %212 = vector.shape_cast %211 : vector<1x16x512xf32> to vector<16x512xf32>
    %213 = arith.subf %212, %134 : vector<16x512xf32>
    %cst_121 = arith.constant 5.000000e+00 : f32
    %214 = vector.broadcast %cst_121 : f32 to vector<16x512xf32>
    %215 = arith.mulf %213, %214 : vector<16x512xf32>
    %216 = math.exp %215 : vector<16x512xf32>
    %217 = arith.addf %205, %216 : vector<16x512xf32>
    %218 = arith.subf %135, %212 : vector<16x512xf32>
    %cst_122 = arith.constant 5.000000e+00 : f32
    %219 = vector.broadcast %cst_122 : f32 to vector<16x512xf32>
    %220 = arith.mulf %218, %219 : vector<16x512xf32>
    %221 = math.exp %220 : vector<16x512xf32>
    %222 = arith.addf %210, %221 : vector<16x512xf32>
    %c4_123 = arith.constant 4 : index
    %c0_124 = arith.constant 0 : index
    %c0_125 = arith.constant 0 : index
    %223 = vector.load %arg1[%c4_123, %c0_124, %c0_125] : memref<8x16x512xf32, #tpu.memory_space<vmem>>, vector<1x16x512xf32>
    %224 = vector.shape_cast %223 : vector<1x16x512xf32> to vector<16x512xf32>
    %225 = arith.subf %224, %134 : vector<16x512xf32>
    %cst_126 = arith.constant 5.000000e+00 : f32
    %226 = vector.broadcast %cst_126 : f32 to vector<16x512xf32>
    %227 = arith.mulf %225, %226 : vector<16x512xf32>
    %228 = math.exp %227 : vector<16x512xf32>
    %229 = arith.addf %217, %228 : vector<16x512xf32>
    %230 = arith.subf %135, %224 : vector<16x512xf32>
    %cst_127 = arith.constant 5.000000e+00 : f32
    %231 = vector.broadcast %cst_127 : f32 to vector<16x512xf32>
    %232 = arith.mulf %230, %231 : vector<16x512xf32>
    %233 = math.exp %232 : vector<16x512xf32>
    %234 = arith.addf %222, %233 : vector<16x512xf32>
    %c5_128 = arith.constant 5 : index
    %c0_129 = arith.constant 0 : index
    %c0_130 = arith.constant 0 : index
    %235 = vector.load %arg1[%c5_128, %c0_129, %c0_130] : memref<8x16x512xf32, #tpu.memory_space<vmem>>, vector<1x16x512xf32>
    %236 = vector.shape_cast %235 : vector<1x16x512xf32> to vector<16x512xf32>
    %237 = arith.subf %236, %134 : vector<16x512xf32>
    %cst_131 = arith.constant 5.000000e+00 : f32
    %238 = vector.broadcast %cst_131 : f32 to vector<16x512xf32>
    %239 = arith.mulf %237, %238 : vector<16x512xf32>
    %240 = math.exp %239 : vector<16x512xf32>
    %241 = arith.addf %229, %240 : vector<16x512xf32>
    %242 = arith.subf %135, %236 : vector<16x512xf32>
    %cst_132 = arith.constant 5.000000e+00 : f32
    %243 = vector.broadcast %cst_132 : f32 to vector<16x512xf32>
    %244 = arith.mulf %242, %243 : vector<16x512xf32>
    %245 = math.exp %244 : vector<16x512xf32>
    %246 = arith.addf %234, %245 : vector<16x512xf32>
    %c6_133 = arith.constant 6 : index
    %c0_134 = arith.constant 0 : index
    %c0_135 = arith.constant 0 : index
    %247 = vector.load %arg1[%c6_133, %c0_134, %c0_135] : memref<8x16x512xf32, #tpu.memory_space<vmem>>, vector<1x16x512xf32>
    %248 = vector.shape_cast %247 : vector<1x16x512xf32> to vector<16x512xf32>
    %249 = arith.subf %248, %134 : vector<16x512xf32>
    %cst_136 = arith.constant 5.000000e+00 : f32
    %250 = vector.broadcast %cst_136 : f32 to vector<16x512xf32>
    %251 = arith.mulf %249, %250 : vector<16x512xf32>
    %252 = math.exp %251 : vector<16x512xf32>
    %253 = arith.addf %241, %252 : vector<16x512xf32>
    %254 = arith.subf %135, %248 : vector<16x512xf32>
    %cst_137 = arith.constant 5.000000e+00 : f32
    %255 = vector.broadcast %cst_137 : f32 to vector<16x512xf32>
    %256 = arith.mulf %254, %255 : vector<16x512xf32>
    %257 = math.exp %256 : vector<16x512xf32>
    %258 = arith.addf %246, %257 : vector<16x512xf32>
    %c7_138 = arith.constant 7 : index
    %c0_139 = arith.constant 0 : index
    %c0_140 = arith.constant 0 : index
    %259 = vector.load %arg1[%c7_138, %c0_139, %c0_140] : memref<8x16x512xf32, #tpu.memory_space<vmem>>, vector<1x16x512xf32>
    %260 = vector.shape_cast %259 : vector<1x16x512xf32> to vector<16x512xf32>
    %261 = arith.subf %260, %134 : vector<16x512xf32>
    %cst_141 = arith.constant 5.000000e+00 : f32
    %262 = vector.broadcast %cst_141 : f32 to vector<16x512xf32>
    %263 = arith.mulf %261, %262 : vector<16x512xf32>
    %264 = math.exp %263 : vector<16x512xf32>
    %265 = arith.addf %253, %264 : vector<16x512xf32>
    %266 = arith.subf %135, %260 : vector<16x512xf32>
    %cst_142 = arith.constant 5.000000e+00 : f32
    %267 = vector.broadcast %cst_142 : f32 to vector<16x512xf32>
    %268 = arith.mulf %266, %267 : vector<16x512xf32>
    %269 = math.exp %268 : vector<16x512xf32>
    %270 = arith.addf %258, %269 : vector<16x512xf32>
    %271 = arith.subf %134, %135 : vector<16x512xf32>
    %272 = math.log %265 : vector<16x512xf32>
    %273 = math.log %270 : vector<16x512xf32>
    %274 = arith.addf %272, %273 : vector<16x512xf32>
    %cst_143 = arith.constant 2.000000e-01 : f32
    %275 = vector.broadcast %cst_143 : f32 to vector<16x512xf32>
    %276 = arith.mulf %275, %274 : vector<16x512xf32>
    %277 = arith.addf %271, %276 : vector<16x512xf32>
    %278 = tpu.concatenate %277, %172 in 0 : vector<16x512xf32>, vector<16x512xf32> -> vector<32x512xf32>
    %c0_144 = arith.constant 0 : index
    %c0_145 = arith.constant 0 : index
    %279 = vector.load %arg2[%c0_144, %c0_145] : memref<112x128xf32, #tpu.memory_space<vmem>>, vector<32x32xf32>
    %cst_146 = arith.constant dense<0.000000e+00> : vector<32x512xf32>
    %280 = tpu.matmul %279, %278, %cst_146 {dimension_numbers = #tpu.dot_dimension_numbers<[1], [0], [0], [1], [0, 0, 1, 1], [], []>} : vector<32x32xf32>, vector<32x512xf32>, vector<32x512xf32> -> vector<32x512xf32>
    %c32 = arith.constant 32 : index
    %c0_147 = arith.constant 0 : index
    %281 = vector.load %arg2[%c32, %c0_147] : memref<112x128xf32, #tpu.memory_space<vmem>>, vector<32x1xf32>
    %282 = vector.broadcast %281 : vector<32x1xf32> to vector<32x512xf32>
    %283 = arith.addf %280, %282 : vector<32x512xf32>
    %cst_148 = arith.constant 0.000000e+00 : f32
    %284 = vector.broadcast %cst_148 : f32 to vector<32x512xf32>
    %285 = arith.maximumf %283, %284 : vector<32x512xf32>
    %c32_149 = arith.constant 32 : index
    %c1_150 = arith.constant 1 : index
    %286 = vector.load %arg2[%c32_149, %c1_150] : memref<112x128xf32, #tpu.memory_space<vmem>>, vector<32x1xf32>
    %287 = vector.broadcast %286 : vector<32x1xf32> to vector<32x512xf32>
    %288 = arith.mulf %285, %287 : vector<32x512xf32>
    %c32_151 = arith.constant 32 : index
    %c2_152 = arith.constant 2 : index
    %289 = vector.load %arg2[%c32_151, %c2_152] : memref<112x128xf32, #tpu.memory_space<vmem>>, vector<32x1xf32>
    %290 = vector.broadcast %289 : vector<32x1xf32> to vector<32x512xf32>
    %291 = arith.addf %288, %290 : vector<32x512xf32>
    %c64 = arith.constant 64 : index
    %c0_153 = arith.constant 0 : index
    %292 = vector.load %arg2[%c64, %c0_153] : memref<112x128xf32, #tpu.memory_space<vmem>>, vector<16x32xf32>
    %cst_154 = arith.constant dense<0.000000e+00> : vector<16x512xf32>
    %293 = tpu.matmul %292, %291, %cst_154 {dimension_numbers = #tpu.dot_dimension_numbers<[1], [0], [0], [1], [0, 0, 1, 1], [], []>} : vector<16x32xf32>, vector<32x512xf32>, vector<16x512xf32> -> vector<16x512xf32>
    %c80 = arith.constant 80 : index
    %c0_155 = arith.constant 0 : index
    %294 = vector.load %arg2[%c80, %c0_155] : memref<112x128xf32, #tpu.memory_space<vmem>>, vector<16x1xf32>
    %295 = vector.broadcast %294 : vector<16x1xf32> to vector<16x512xf32>
    %296 = arith.addf %293, %295 : vector<16x512xf32>
    %cst_156 = arith.constant 0.000000e+00 : f32
    %297 = vector.broadcast %cst_156 : f32 to vector<16x512xf32>
    %298 = arith.maximumf %296, %297 : vector<16x512xf32>
    %c80_157 = arith.constant 80 : index
    %c1_158 = arith.constant 1 : index
    %299 = vector.load %arg2[%c80_157, %c1_158] : memref<112x128xf32, #tpu.memory_space<vmem>>, vector<16x1xf32>
    %300 = vector.broadcast %299 : vector<16x1xf32> to vector<16x512xf32>
    %301 = arith.mulf %298, %300 : vector<16x512xf32>
    %c80_159 = arith.constant 80 : index
    %c2_160 = arith.constant 2 : index
    %302 = vector.load %arg2[%c80_159, %c2_160] : memref<112x128xf32, #tpu.memory_space<vmem>>, vector<16x1xf32>
    %303 = vector.broadcast %302 : vector<16x1xf32> to vector<16x512xf32>
    %304 = arith.addf %301, %303 : vector<16x512xf32>
    %c96 = arith.constant 96 : index
    %c0_161 = arith.constant 0 : index
    %305 = vector.load %arg2[%c96, %c0_161] : memref<112x128xf32, #tpu.memory_space<vmem>>, vector<8x16xf32>
    %cst_162 = arith.constant dense<0.000000e+00> : vector<8x512xf32>
    %306 = tpu.matmul %305, %304, %cst_162 {dimension_numbers = #tpu.dot_dimension_numbers<[1], [0], [0], [1], [0, 0, 1, 1], [], []>} : vector<8x16xf32>, vector<16x512xf32>, vector<8x512xf32> -> vector<8x512xf32>
    %c104 = arith.constant 104 : index
    %c0_163 = arith.constant 0 : index
    %307 = vector.load %arg2[%c104, %c0_163] : memref<112x128xf32, #tpu.memory_space<vmem>>, vector<8x1xf32>
    %308 = vector.broadcast %307 : vector<8x1xf32> to vector<8x512xf32>
    %309 = arith.addf %306, %308 : vector<8x512xf32>
    %c0_164 = arith.constant 0 : index
    %c0_165 = arith.constant 0 : index
    %310 = vector.load %arg3[%c0_164, %c0_165] : memref<8x512xf32, #tpu.memory_space<vmem>>, vector<8x512xf32>
    tpu.vector_store %arg3[%c0_164, %c0_165], %309 {strides = array<i32>} : memref<8x512xf32, #tpu.memory_space<vmem>>, vector<8x512xf32>,
    return
  }
  func.func @transform_0(%arg0: i32) -> (i32, i32, i32) {
    %c0_i32 = arith.constant 0 : i32
    %c0_i32_0 = arith.constant 0 : i32
    %c0_i32_1 = arith.constant 0 : i32
    return %c0_i32, %c0_i32_0, %arg0 : i32, i32, i32
  }
  func.func @transform_1(%arg0: i32) -> (i32, i32) {
    %c0_i32 = arith.constant 0 : i32
    %c0_i32_0 = arith.constant 0 : i32
    %c0_i32_1 = arith.constant 0 : i32
    return %c0_i32, %c0_i32_0 : i32, i32
  }
  func.func @transform_2(%arg0: i32) -> (i32, i32) {
    %c0_i32 = arith.constant 0 : i32
    %c0_i32_0 = arith.constant 0 : i32
    return %c0_i32, %arg0 : i32, i32
  }
}

</mosaic_0001>

<llo_original>
// kernel: tpu_custom_call.1
$region0: #{tpu_custom_call.1}
  #allocation0 [shape = 'u32[]', space=smem, size = 0x4, offset = 0x4, fixed_abs, tag = 'smem constant byte address 0x4 - core index']
  #allocation1 [shape = 'u32[144,128]{1,0:T(1,128)}', space=vmem, size = 0x12000, scoped, tag = 'internal scratch']
  %s0 = inlined_call_operand.hbm [shape: f32[8,16,2048], index: 0, kind: input, shape index: {}]
  %s1 = inlined_call_operand.hbm [shape: f32[112,128], index: 1, kind: input, shape index: {}]
  %s2 = inlined_call_operand.hbm [shape: f32[8,2048], index: 2, kind: output, shape index: {}]
  %s3 = sld [smem:[#allocation0]]
  $region49: #{tpu_custom_call.1} parent=0
    _
  %s5 = ssub.s32 1, %s3
  %s6 = scalar_select 0, %s5, %s3
  $region1: #{tpu_custom_call.1} parent=0
    #allocation2 [shape = 'u8[524288]{0}', space=vmem, size = 0x80000, scoped, tag = 'input window, operand 0']
    #allocation3 [shape = 's32[2]{0}', space=sflag, size = 0x8, scoped, tag = 'scoped memory for tpu_custom_call.1']
    #allocation4 [shape = 's32[2]{0}', space=sflag, size = 0x8, scoped, tag = 'scoped memory for tpu_custom_call.1']
    #allocation5 [shape = 'u8[57344]{0}', space=vmem, size = 0xe000, scoped, tag = 'input window, operand 1, single buffered']
    #allocation6 [shape = 's32[1]{0}', space=sflag, size = 0x4, scoped, tag = 'scoped memory for tpu_custom_call.1']
    #allocation7 [shape = 'u8[32768]{0}', space=vmem, size = 0x8000, scoped, tag = 'output window, operand 0']
    %7 = vsyncpa [#allocation3], 0
    %s8 = scalar_lea.sflag [#allocation3], 1
    %9 = vsyncpa %s8, 0
    %10 = vsyncpa [#allocation6], 0
    %11 = vsyncpa [#allocation4], 0
    %s12 = scalar_lea.sflag [#allocation4], 1
    %13 = vsyncpa %s12, 0
    loop: start=0, step=1, limit=6
    $region2: #{tpu_custom_call.1} parent=1 // loop_pre_header
      _
    $region3: #{tpu_custom_call.1} parent=1 // loop_header
      %s15 = sphi 0, %s19
      %p16 = scmp.ge.s32.totalorder %s15, 6
      %s25 = sphi 0, %s27
      %s28 = sphi 0, %s25
      %s29 = sphi 0, %s28
      %s45 = sphi 0, %s29
      %s49 = sphi 0, %s49
      %s51 = sphi 0, %s49
      %s52 = sphi 0, %s51
      %s66 = sphi 0, %s52
      %s72 = sphi 0, %s74
      %s75 = sphi 0, %s72
      %s76 = sphi 0, %s75
      %s92 = sphi 0, %s76
    $region4: #{tpu_custom_call.1} parent=1 // loop_header_branch
      %18 = sbr.rel (%p16) target = $region8
    $region5: #{tpu_custom_call.1} parent=1 // loop_body
      %s20 = ssub.s32 %s15, 1
      %s21 = ssub.s32 %s15, 2
      %s22 = sadd.s32 %s15, 1
      %s23 = ssub.s32 %s15, %s22
      %p24 = scmp.eq.s32.totalorder %s23, 0
      %s26 = sadd.s32 %s25, 1
      %s27 = scalar_select %p24, %s25, %s26
      %p30 = pneg %p24
      %p31 = scmp.eq.s32.totalorder %s15, 3
      %p32 = por %p30, %p31
      %p33 = scmp.ne.s32.totalorder %s25, %s28
      %p34 = scmp.eq.s32.totalorder %s15, 0
      %p35 = por %p33, %p34
      %p36 = scmp.ne.s32.totalorder %s25, %s28
      %p37 = scmp.eq.s32.totalorder %s20, 3
      %p38 = por %p36, %p37
      %p39 = scmp.ne.s32.totalorder %s28, %s29
      %p40 = scmp.eq.s32.totalorder %s20, 0
      %p41 = por %p39, %p40
      %p42 = scmp.ne.s32.totalorder %s28, %s29
      %p43 = scmp.eq.s32.totalorder %s21, 3
      %p44 = por %p42, %p43
      %p46 = scmp.ne.s32.totalorder %s29, %s45
      %p47 = scmp.eq.s32.totalorder %s21, 0
      %p48 = por %p46, %p47
      %s50 = sadd.s32 %s49, 1
      %p53 = scmp.eq.s32.totalorder %s15, 3
      %p54 = scmp.ne.s32.totalorder %s49, %s51
      %p55 = scmp.eq.s32.totalorder %s15, 0
      %p56 = por %p54, %p55
      %p57 = scmp.ne.s32.totalorder %s49, %s51
      %p58 = scmp.eq.s32.totalorder %s20, 3
      %p59 = por %p57, %p58
      %p60 = scmp.ne.s32.totalorder %s51, %s52
      %p61 = scmp.eq.s32.totalorder %s20, 0
      %p62 = por %p60, %p61
      %p63 = scmp.ne.s32.totalorder %s51, %s52
      %p64 = scmp.eq.s32.totalorder %s21, 3
      %p65 = por %p63, %p64
      %p67 = scmp.ne.s32.totalorder %s52, %s66
      %p68 = scmp.eq.s32.totalorder %s21, 0
      %p69 = por %p67, %p68
      %s70 = ssub.s32 %s15, %s22
      %p71 = scmp.eq.s32.totalorder %s70, 0
      %s73 = sadd.s32 %s72, 1
      %s74 = scalar_select %p71, %s72, %s73
      %p77 = pneg %p71
      %p78 = scmp.eq.s32.totalorder %s15, 3
      %p79 = por %p77, %p78
      %p80 = scmp.ne.s32.totalorder %s72, %s75
      %p81 = scmp.eq.s32.totalorder %s15, 0
      %p82 = por %p80, %p81
      %p83 = scmp.ne.s32.totalorder %s72, %s75
      %p84 = scmp.eq.s32.totalorder %s20, 3
      %p85 = por %p83, %p84
      %p86 = scmp.ne.s32.totalorder %s75, %s76
      %p87 = scmp.eq.s32.totalorder %s20, 0
      %p88 = por %p86, %p87
      %p89 = scmp.ne.s32.totalorder %s75, %s76
      %p90 = scmp.eq.s32.totalorder %s21, 3
      %p91 = por %p89, %p90
      %p93 = scmp.ne.s32.totalorder %s76, %s92
      %p94 = scmp.eq.s32.totalorder %s21, 0
      %p95 = por %p93, %p94
      %p96 = scmp.le.s32.totalorder 1, %s15
      %p97 = scmp.lt.s32.totalorder %s15, 5
      %p98 = pnand %p96, %p97
      %p99 = pneg %p98
      // Predicated region
      $region9: #{tpu_custom_call.1} parent=5 // pred_check
        _
      $region10: #{tpu_custom_call.1} parent=5 // pred_check_branch
        %101 = sbr.rel (%p98) target = $region12
      $region11: #{tpu_custom_call.1} parent=5 // pred_region
        %s102 = ssub.s32 %s15, 1
        // Predicated region
        $region13: #{tpu_custom_call.1} parent=11 // pred_check
          %p103 = pneg %p62
        $region14: #{tpu_custom_call.1} parent=11 // pred_check_branch
          %105 = sbr.rel (%p103) target = $region16
        $region15: #{tpu_custom_call.1} parent=11 // pred_region
          %s107 = ssub.s32 1792, 1792
          %108 = vsyncadd [#allocation6], %s107
          %s109 = sshll.u32 [#allocation5], 4
          %s110 = int_to_ptr.vmem [resolvable:$true] %s109
          %115 = dma.hbm_to_vmem [thread:$0]  %s1, 1792, %s110, [#allocation6], 128, 128, 8
        $region16: #{tpu_custom_call.1} parent=11 // pred_fallthru
          _
      $region12: #{tpu_custom_call.1} parent=5 // pred_fallthru
        _
      %p116 = scmp.lt.s32.totalorder %s15, 4
      // Predicated region
      $region17: #{tpu_custom_call.1} parent=5 // pred_check
        %p117 = pneg %p116
      $region18: #{tpu_custom_call.1} parent=5 // pred_check_branch
        %119 = sbr.rel (%p117) target = $region20
      $region19: #{tpu_custom_call.1} parent=5 // pred_region
        // Predicated region
        $region21: #{tpu_custom_call.1} parent=19 // pred_check
          %p120 = pneg %p35
        $region22: #{tpu_custom_call.1} parent=19 // pred_check_branch
          %122 = sbr.rel (%p120) target = $region24
        $region23: #{tpu_custom_call.1} parent=19 // pred_region
          %s123 = sand.u32 %s25, 1
          %s124 = scalar_lea.sflag [#allocation3], %s123
          %s125 = sand.u32 %s25, 1
          %s126 = smul.addr %s125, 512
          %s127 = scalar_lea.vmem [#allocation2], %s126
          %s128 = smul.u32 4, %s15
          %s130 = ssub.s32 8192, 8192
          %131 = vsyncadd %s124, %s130
          %s132 = smul.addr %s128, 128
          %s133 = scalar_lea.hbm %s0, %s132
          %s134 = sshll.u32 %s127, 4
          %s135 = int_to_ptr.vmem [resolvable:$true] %s134
          %140 = dma.hbm_to_vmem [thread:$0]  %s133, 8192, %s135, %s124, 2048, 512, 32
        $region24: #{tpu_custom_call.1} parent=19 // pred_fallthru
          _
      $region20: #{tpu_custom_call.1} parent=5 // pred_fallthru
        _
      %p141 = scmp.le.s32.totalorder 1, %s15
      %p142 = scmp.lt.s32.totalorder %s15, 5
      %p143 = pnand %p141, %p142
      %p144 = pneg %p143
      // Predicated region
      $region25: #{tpu_custom_call.1} parent=5 // pred_check
        _
      $region26: #{tpu_custom_call.1} parent=5 // pred_check_branch
        %146 = sbr.rel (%p143) target = $region28
      $region27: #{tpu_custom_call.1} parent=5 // pred_region
        %s147 = ssub.s32 %s15, 1
        %s148 = sand.u32 %s28, 1
        %s149 = scalar_lea.sflag [#allocation3], %s148
        %s150 = sand.u32 %s28, 1
        %s151 = smul.addr %s150, 512
        %s152 = scalar_lea.vmem [#allocation2], %s151
        // Predicated region
        $region29: #{tpu_custom_call.1} parent=27 // pred_check
          %p153 = pneg %p41
        $region30: #{tpu_custom_call.1} parent=27 // pred_check_branch
          %155 = sbr.rel (%p153) target = $region32
        $region31: #{tpu_custom_call.1} parent=27 // pred_region
          %156 = dma.done %s149, 8192
        $region32: #{tpu_custom_call.1} parent=27 // pred_fallthru
          _
        // Predicated region
        $region33: #{tpu_custom_call.1} parent=27 // pred_check
          %p157 = pneg %p62
        $region34: #{tpu_custom_call.1} parent=27 // pred_check_branch
          %159 = sbr.rel (%p157) target = $region36
        $region35: #{tpu_custom_call.1} parent=27 // pred_region
          %160 = dma.done [#allocation6], 1792
        $region36: #{tpu_custom_call.1} parent=27 // pred_fallthru
          _
        %s161 = sand.u32 %s28, 1
        %s162 = scalar_lea.sflag [#allocation3], %s161
        %s163 = sand.u32 %s28, 1
        %s164 = smul.addr %s163, 512
        %s165 = scalar_lea.vmem [#allocation2], %s164
        %p166 = pneg %p41
        %p167 = pneg %p38
        %p168 = pneg %p62
        %p169 = pneg %p59
        %p170 = pneg %p88
        %p171 = pneg %p85
        %s172 = sand.u32 %s75, 1
        %s173 = scalar_lea.sflag [#allocation4], %s172
        %s174 = sand.u32 %s75, 1
        %s175 = smul.addr %s174, 32
        %s176 = scalar_lea.vmem [#allocation7], %s175
        %s177 = smul.u32 4, %s20
        %s178 = smul.u32 4, %s20
        %v179 = vld [vmem:[%s152] sm:$0xff]
        %v180 = vld [vmem:[%s152 + $0x8] sm:$0xff]
        %v181 = vld [vmem:[%s152 + $0x10] sm:$0xff]
        %v182 = vld [vmem:[%s152 + $0x18] sm:$0xff]
        %v183 = vld [vmem:[%s152 + $0x20] sm:$0xff]
        %v184 = vld [vmem:[%s152 + $0x28] sm:$0xff]
        %v185 = vld [vmem:[%s152 + $0x30] sm:$0xff]
        %v186 = vld [vmem:[%s152 + $0x38] sm:$0xff]
        %s187 = scalar_lea.vmem %s152, 64 [#allocation2]
        %v188 = vld [vmem:[%s187] sm:$0xff]
        %v189 = vld [vmem:[%s187 + $0x8] sm:$0xff]
        %v190 = vld [vmem:[%s187 + $0x10] sm:$0xff]
        %v191 = vld [vmem:[%s187 + $0x18] sm:$0xff]
        %v192 = vld [vmem:[%s187 + $0x20] sm:$0xff]
        %v193 = vld [vmem:[%s187 + $0x28] sm:$0xff]
        %v194 = vld [vmem:[%s187 + $0x30] sm:$0xff]
        %v195 = vld [vmem:[%s187 + $0x38] sm:$0xff]
        %v196 = vmax.f32 %v179, %v188
        %v197 = vmax.f32 %v180, %v189
        %v198 = vmax.f32 %v181, %v190
        %v199 = vmax.f32 %v182, %v191
        %v200 = vmax.f32 %v183, %v192
        %v201 = vmax.f32 %v184, %v193
        %v202 = vmax.f32 %v185, %v194
        %v203 = vmax.f32 %v186, %v195
        %v204 = vmin.f32 %v179, %v188
        %v205 = vmin.f32 %v180, %v189
        %v206 = vmin.f32 %v181, %v190
        %v207 = vmin.f32 %v182, %v191
        %v208 = vmin.f32 %v183, %v192
        %v209 = vmin.f32 %v184, %v193
        %v210 = vmin.f32 %v185, %v194
        %v211 = vmin.f32 %v186, %v195
        %v212 = vsub.f32 %v179, %v188
        %v213 = vsub.f32 %v180, %v189
        %v214 = vsub.f32 %v181, %v190
        %v215 = vsub.f32 %v182, %v191
        %v216 = vsub.f32 %v183, %v192
        %v217 = vsub.f32 %v184, %v193
        %v218 = vsub.f32 %v185, %v194
        %v219 = vsub.f32 %v186, %v195
        %v220 = vand.u32 2147483647, %v212
        %v221 = vand.u32 2147483647, %v213
        %v222 = vand.u32 2147483647, %v214
        %v223 = vand.u32 2147483647, %v215
        %v224 = vand.u32 2147483647, %v216
        %v225 = vand.u32 2147483647, %v217
        %v226 = vand.u32 2147483647, %v218
        %v227 = vand.u32 2147483647, %v219
        %v228 = vadd.f32 %v220, 0.0
        %v229 = vadd.f32 %v221, 0.0
        %v230 = vadd.f32 %v222, 0.0
        %v231 = vadd.f32 %v223, 0.0
        %v232 = vadd.f32 %v224, 0.0
        %v233 = vadd.f32 %v225, 0.0
        %v234 = vadd.f32 %v226, 0.0
        %v235 = vadd.f32 %v227, 0.0
        %s236 = scalar_lea.vmem %s152, 128 [#allocation2]
        %v237 = vld [vmem:[%s236] sm:$0xff]
        %v238 = vld [vmem:[%s236 + $0x8] sm:$0xff]
        %v239 = vld [vmem:[%s236 + $0x10] sm:$0xff]
        %v240 = vld [vmem:[%s236 + $0x18] sm:$0xff]
        %v241 = vld [vmem:[%s236 + $0x20] sm:$0xff]
        %v242 = vld [vmem:[%s236 + $0x28] sm:$0xff]
        %v243 = vld [vmem:[%s236 + $0x30] sm:$0xff]
        %v244 = vld [vmem:[%s236 + $0x38] sm:$0xff]
        %v245 = vmax.f32 %v196, %v237
        %v246 = vmax.f32 %v197, %v238
        %v247 = vmax.f32 %v198, %v239
        %v248 = vmax.f32 %v199, %v240
        %v249 = vmax.f32 %v200, %v241
        %v250 = vmax.f32 %v201, %v242
        %v251 = vmax.f32 %v202, %v243
        %v252 = vmax.f32 %v203, %v244
        %v253 = vmin.f32 %v204, %v237
        %v254 = vmin.f32 %v205, %v238
        %v255 = vmin.f32 %v206, %v239
        %v256 = vmin.f32 %v207, %v240
        %v257 = vmin.f32 %v208, %v241
        %v258 = vmin.f32 %v209, %v242
        %v259 = vmin.f32 %v210, %v243
        %v260 = vmin.f32 %v211, %v244
        %v261 = vsub.f32 %v179, %v237
        %v262 = vsub.f32 %v180, %v238
        %v263 = vsub.f32 %v181, %v239
        %v264 = vsub.f32 %v182, %v240
        %v265 = vsub.f32 %v183, %v241
        %v266 = vsub.f32 %v184, %v242
        %v267 = vsub.f32 %v185, %v243
        %v268 = vsub.f32 %v186, %v244
        %v269 = vand.u32 2147483647, %v261
        %v270 = vand.u32 2147483647, %v262
        %v271 = vand.u32 2147483647, %v263
        %v272 = vand.u32 2147483647, %v264
        %v273 = vand.u32 2147483647, %v265
        %v274 = vand.u32 2147483647, %v266
        %v275 = vand.u32 2147483647, %v267
        %v276 = vand.u32 2147483647, %v268
        %v277 = vadd.f32 %v228, %v269
        %v278 = vadd.f32 %v229, %v270
        %v279 = vadd.f32 %v230, %v271
        %v280 = vadd.f32 %v231, %v272
        %v281 = vadd.f32 %v232, %v273
        %v282 = vadd.f32 %v233, %v274
        %v283 = vadd.f32 %v234, %v275
        %v284 = vadd.f32 %v235, %v276
        %v285 = vsub.f32 %v188, %v237
        %v286 = vsub.f32 %v189, %v238
        %v287 = vsub.f32 %v190, %v239
        %v288 = vsub.f32 %v191, %v240
        %v289 = vsub.f32 %v192, %v241
        %v290 = vsub.f32 %v193, %v242
        %v291 = vsub.f32 %v194, %v243
        %v292 = vsub.f32 %v195, %v244
        %v293 = vand.u32 2147483647, %v285
        %v294 = vand.u32 2147483647, %v286
        %v295 = vand.u32 2147483647, %v287
        %v296 = vand.u32 2147483647, %v288
        %v297 = vand.u32 2147483647, %v289
        %v298 = vand.u32 2147483647, %v290
        %v299 = vand.u32 2147483647, %v291
        %v300 = vand.u32 2147483647, %v292
        %v301 = vadd.f32 %v277, %v293
        %v302 = vadd.f32 %v278, %v294
        %v303 = vadd.f32 %v279, %v295
        %v304 = vadd.f32 %v280, %v296
        %v305 = vadd.f32 %v281, %v297
        %v306 = vadd.f32 %v282, %v298
        %v307 = vadd.f32 %v283, %v299
        %v308 = vadd.f32 %v284, %v300
        %s309 = scalar_lea.vmem %s152, 192 [#allocation2]
        %v310 = vld [vmem:[%s309] sm:$0xff]
        %v311 = vld [vmem:[%s309 + $0x8] sm:$0xff]
        %v312 = vld [vmem:[%s309 + $0x10] sm:$0xff]
        %v313 = vld [vmem:[%s309 + $0x18] sm:$0xff]
        %v314 = vld [vmem:[%s309 + $0x20] sm:$0xff]
        %v315 = vld [vmem:[%s309 + $0x28] sm:$0xff]
        %v316 = vld [vmem:[%s309 + $0x30] sm:$0xff]
        %v317 = vld [vmem:[%s309 + $0x38] sm:$0xff]
        %v318 = vmax.f32 %v245, %v310
        %v319 = vmax.f32 %v246, %v311
        %v320 = vmax.f32 %v247, %v312
        %v321 = vmax.f32 %v248, %v313
        %v322 = vmax.f32 %v249, %v314
        %v323 = vmax.f32 %v250, %v315
        %v324 = vmax.f32 %v251, %v316
        %v325 = vmax.f32 %v252, %v317
        %v326 = vmin.f32 %v253, %v310
        %v327 = vmin.f32 %v254, %v311
        %v328 = vmin.f32 %v255, %v312
        %v329 = vmin.f32 %v256, %v313
        %v330 = vmin.f32 %v257, %v314
        %v331 = vmin.f32 %v258, %v315
        %v332 = vmin.f32 %v259, %v316
        %v333 = vmin.f32 %v260, %v317
        %v334 = vsub.f32 %v179, %v310
        %v335 = vsub.f32 %v180, %v311
        %v336 = vsub.f32 %v181, %v312
        %v337 = vsub.f32 %v182, %v313
        %v338 = vsub.f32 %v183, %v314
        %v339 = vsub.f32 %v184, %v315
        %v340 = vsub.f32 %v185, %v316
        %v341 = vsub.f32 %v186, %v317
        %v342 = vand.u32 2147483647, %v334
        %v343 = vand.u32 2147483647, %v335
        %v344 = vand.u32 2147483647, %v336
        %v345 = vand.u32 2147483647, %v337
        %v346 = vand.u32 2147483647, %v338
        %v347 = vand.u32 2147483647, %v339
        %v348 = vand.u32 2147483647, %v340
        %v349 = vand.u32 2147483647, %v341
        %v350 = vadd.f32 %v301, %v342
        %v351 = vadd.f32 %v302, %v343
        %v352 = vadd.f32 %v303, %v344
        %v353 = vadd.f32 %v304, %v345
        %v354 = vadd.f32 %v305, %v346
        %v355 = vadd.f32 %v306, %v347
        %v356 = vadd.f32 %v307, %v348
        %v357 = vadd.f32 %v308, %v349
        %v358 = vsub.f32 %v188, %v310
        %v359 = vsub.f32 %v189, %v311
        %v360 = vsub.f32 %v190, %v312
        %v361 = vsub.f32 %v191, %v313
        %v362 = vsub.f32 %v192, %v314
        %v363 = vsub.f32 %v193, %v315
        %v364 = vsub.f32 %v194, %v316
        %v365 = vsub.f32 %v195, %v317
        %v366 = vand.u32 2147483647, %v358
        %v367 = vand.u32 2147483647, %v359
        %v368 = vand.u32 2147483647, %v360
        %v369 = vand.u32 2147483647, %v361
        %v370 = vand.u32 2147483647, %v362
        %v371 = vand.u32 2147483647, %v363
        %v372 = vand.u32 2147483647, %v364
        %v373 = vand.u32 2147483647, %v365
        %v374 = vadd.f32 %v350, %v366
        %v375 = vadd.f32 %v351, %v367
        %v376 = vadd.f32 %v352, %v368
        %v377 = vadd.f32 %v353, %v369
        %v378 = vadd.f32 %v354, %v370
        %v379 = vadd.f32 %v355, %v371
        %v380 = vadd.f32 %v356, %v372
        %v381 = vadd.f32 %v357, %v373
        %v382 = vsub.f32 %v237, %v310
        %v383 = vsub.f32 %v238, %v311
        %v384 = vsub.f32 %v239, %v312
        %v385 = vsub.f32 %v240, %v313
        %v386 = vsub.f32 %v241, %v314
        %v387 = vsub.f32 %v242, %v315
        %v388 = vsub.f32 %v243, %v316
        %v389 = vsub.f32 %v244, %v317
        %v390 = vand.u32 2147483647, %v382
        %v391 = vand.u32 2147483647, %v383
        %v392 = vand.u32 2147483647, %v384
        %v393 = vand.u32 2147483647, %v385
        %v394 = vand.u32 2147483647, %v386
        %v395 = vand.u32 2147483647, %v387
        %v396 = vand.u32 2147483647, %v388
        %v397 = vand.u32 2147483647, %v389
        %v398 = vadd.f32 %v374, %v390
        %v399 = vadd.f32 %v375, %v391
        %v400 = vadd.f32 %v376, %v392
        %v401 = vadd.f32 %v377, %v393
        %v402 = vadd.f32 %v378, %v394
        %v403 = vadd.f32 %v379, %v395
        %v404 = vadd.f32 %v380, %v396
        %v405 = vadd.f32 %v381, %v397
        %s406 = scalar_lea.vmem %s152, 256 [#allocation2]
        %v407 = vld [vmem:[%s406] sm:$0xff]
        %v408 = vld [vmem:[%s406 + $0x8] sm:$0xff]
        %v409 = vld [vmem:[%s406 + $0x10] sm:$0xff]
        %v410 = vld [vmem:[%s406 + $0x18] sm:$0xff]
        %v411 = vld [vmem:[%s406 + $0x20] sm:$0xff]
        %v412 = vld [vmem:[%s406 + $0x28] sm:$0xff]
        %v413 = vld [vmem:[%s406 + $0x30] sm:$0xff]
        %v414 = vld [vmem:[%s406 + $0x38] sm:$0xff]
        %v415 = vmax.f32 %v318, %v407
        %v416 = vmax.f32 %v319, %v408
        %v417 = vmax.f32 %v320, %v409
        %v418 = vmax.f32 %v321, %v410
        %v419 = vmax.f32 %v322, %v411
        %v420 = vmax.f32 %v323, %v412
        %v421 = vmax.f32 %v324, %v413
        %v422 = vmax.f32 %v325, %v414
        %v423 = vmin.f32 %v326, %v407
        %v424 = vmin.f32 %v327, %v408
        %v425 = vmin.f32 %v328, %v409
        %v426 = vmin.f32 %v329, %v410
        %v427 = vmin.f32 %v330, %v411
        %v428 = vmin.f32 %v331, %v412
        %v429 = vmin.f32 %v332, %v413
        %v430 = vmin.f32 %v333, %v414
        %v431 = vsub.f32 %v179, %v407
        %v432 = vsub.f32 %v180, %v408
        %v433 = vsub.f32 %v181, %v409
        %v434 = vsub.f32 %v182, %v410
        %v435 = vsub.f32 %v183, %v411
        %v436 = vsub.f32 %v184, %v412
        %v437 = vsub.f32 %v185, %v413
        %v438 = vsub.f32 %v186, %v414
        %v439 = vand.u32 2147483647, %v431
        %v440 = vand.u32 2147483647, %v432
        %v441 = vand.u32 2147483647, %v433
        %v442 = vand.u32 2147483647, %v434
        %v443 = vand.u32 2147483647, %v435
        %v444 = vand.u32 2147483647, %v436
        %v445 = vand.u32 2147483647, %v437
        %v446 = vand.u32 2147483647, %v438
        %v447 = vadd.f32 %v398, %v439
        %v448 = vadd.f32 %v399, %v440
        %v449 = vadd.f32 %v400, %v441
        %v450 = vadd.f32 %v401, %v442
        %v451 = vadd.f32 %v402, %v443
        %v452 = vadd.f32 %v403, %v444
        %v453 = vadd.f32 %v404, %v445
        %v454 = vadd.f32 %v405, %v446
        %v455 = vsub.f32 %v188, %v407
        %v456 = vsub.f32 %v189, %v408
        %v457 = vsub.f32 %v190, %v409
        %v458 = vsub.f32 %v191, %v410
        %v459 = vsub.f32 %v192, %v411
        %v460 = vsub.f32 %v193, %v412
        %v461 = vsub.f32 %v194, %v413
        %v462 = vsub.f32 %v195, %v414
        %v463 = vand.u32 2147483647, %v455
        %v464 = vand.u32 2147483647, %v456
        %v465 = vand.u32 2147483647, %v457
        %v466 = vand.u32 2147483647, %v458
        %v467 = vand.u32 2147483647, %v459
        %v468 = vand.u32 2147483647, %v460
        %v469 = vand.u32 2147483647, %v461
        %v470 = vand.u32 2147483647, %v462
        %v471 = vadd.f32 %v447, %v463
        %v472 = vadd.f32 %v448, %v464
        %v473 = vadd.f32 %v449, %v465
        %v474 = vadd.f32 %v450, %v466
        %v475 = vadd.f32 %v451, %v467
        %v476 = vadd.f32 %v452, %v468
        %v477 = vadd.f32 %v453, %v469
        %v478 = vadd.f32 %v454, %v470
        %v479 = vsub.f32 %v237, %v407
        %v480 = vsub.f32 %v238, %v408
        %v481 = vsub.f32 %v239, %v409
        %v482 = vsub.f32 %v240, %v410
        %v483 = vsub.f32 %v241, %v411
        %v484 = vsub.f32 %v242, %v412
        %v485 = vsub.f32 %v243, %v413
        %v486 = vsub.f32 %v244, %v414
        %v487 = vand.u32 2147483647, %v479
        %v488 = vand.u32 2147483647, %v480
        %v489 = vand.u32 2147483647, %v481
        %v490 = vand.u32 2147483647, %v482
        %v491 = vand.u32 2147483647, %v483
        %v492 = vand.u32 2147483647, %v484
        %v493 = vand.u32 2147483647, %v485
        %v494 = vand.u32 2147483647, %v486
        %v495 = vadd.f32 %v471, %v487
        %v496 = vadd.f32 %v472, %v488
        %v497 = vadd.f32 %v473, %v489
        %v498 = vadd.f32 %v474, %v490
        %v499 = vadd.f32 %v475, %v491
        %v500 = vadd.f32 %v476, %v492
        %v501 = vadd.f32 %v477, %v493
        %v502 = vadd.f32 %v478, %v494
        %v503 = vsub.f32 %v310, %v407
        %v504 = vsub.f32 %v311, %v408
        %v505 = vsub.f32 %v312, %v409
        %v506 = vsub.f32 %v313, %v410
        %v507 = vsub.f32 %v314, %v411
        %v508 = vsub.f32 %v315, %v412
        %v509 = vsub.f32 %v316, %v413
        %v510 = vsub.f32 %v317, %v414
        %v511 = vand.u32 2147483647, %v503
        %v512 = vand.u32 2147483647, %v504
        %v513 = vand.u32 2147483647, %v505
        %v514 = vand.u32 2147483647, %v506
        %v515 = vand.u32 2147483647, %v507
        %v516 = vand.u32 2147483647, %v508
        %v517 = vand.u32 2147483647, %v509
        %v518 = vand.u32 2147483647, %v510
        %v519 = vadd.f32 %v495, %v511
        %v520 = vadd.f32 %v496, %v512
        %v521 = vadd.f32 %v497, %v513
        %v522 = vadd.f32 %v498, %v514
        %v523 = vadd.f32 %v499, %v515
        %v524 = vadd.f32 %v500, %v516
        %v525 = vadd.f32 %v501, %v517
        %v526 = vadd.f32 %v502, %v518
        %s527 = scalar_lea.vmem %s152, 320 [#allocation2]
        %v528 = vld [vmem:[%s527] sm:$0xff]
        %v529 = vld [vmem:[%s527 + $0x8] sm:$0xff]
        %v530 = vld [vmem:[%s527 + $0x10] sm:$0xff]
        %v531 = vld [vmem:[%s527 + $0x18] sm:$0xff]
        %v532 = vld [vmem:[%s527 + $0x20] sm:$0xff]
        %v533 = vld [vmem:[%s527 + $0x28] sm:$0xff]
        %v534 = vld [vmem:[%s527 + $0x30] sm:$0xff]
        %v535 = vld [vmem:[%s527 + $0x38] sm:$0xff]
        %v536 = vmax.f32 %v415, %v528
        %v537 = vmax.f32 %v416, %v529
        %v538 = vmax.f32 %v417, %v530
        %v539 = vmax.f32 %v418, %v531
        %v540 = vmax.f32 %v419, %v532
        %v541 = vmax.f32 %v420, %v533
        %v542 = vmax.f32 %v421, %v534
        %v543 = vmax.f32 %v422, %v535
        %v544 = vmin.f32 %v423, %v528
        %v545 = vmin.f32 %v424, %v529
        %v546 = vmin.f32 %v425, %v530
        %v547 = vmin.f32 %v426, %v531
        %v548 = vmin.f32 %v427, %v532
        %v549 = vmin.f32 %v428, %v533
        %v550 = vmin.f32 %v429, %v534
        %v551 = vmin.f32 %v430, %v535
        %v552 = vsub.f32 %v179, %v528
        %v553 = vsub.f32 %v180, %v529
        %v554 = vsub.f32 %v181, %v530
        %v555 = vsub.f32 %v182, %v531
        %v556 = vsub.f32 %v183, %v532
        %v557 = vsub.f32 %v184, %v533
        %v558 = vsub.f32 %v185, %v534
        %v559 = vsub.f32 %v186, %v535
        %v560 = vand.u32 2147483647, %v552
        %v561 = vand.u32 2147483647, %v553
        %v562 = vand.u32 2147483647, %v554
        %v563 = vand.u32 2147483647, %v555
        %v564 = vand.u32 2147483647, %v556
        %v565 = vand.u32 2147483647, %v557
        %v566 = vand.u32 2147483647, %v558
        %v567 = vand.u32 2147483647, %v559
        %v568 = vadd.f32 %v519, %v560
        %v569 = vadd.f32 %v520, %v561
        %v570 = vadd.f32 %v521, %v562
        %v571 = vadd.f32 %v522, %v563
        %v572 = vadd.f32 %v523, %v564
        %v573 = vadd.f32 %v524, %v565
        %v574 = vadd.f32 %v525, %v566
        %v575 = vadd.f32 %v526, %v567
        %v576 = vsub.f32 %v188, %v528
        %v577 = vsub.f32 %v189, %v529
        %v578 = vsub.f32 %v190, %v530
        %v579 = vsub.f32 %v191, %v531
        %v580 = vsub.f32 %v192, %v532
        %v581 = vsub.f32 %v193, %v533
        %v582 = vsub.f32 %v194, %v534
        %v583 = vsub.f32 %v195, %v535
        %v584 = vand.u32 2147483647, %v576
        %v585 = vand.u32 2147483647, %v577
        %v586 = vand.u32 2147483647, %v578
        %v587 = vand.u32 2147483647, %v579
        %v588 = vand.u32 2147483647, %v580
        %v589 = vand.u32 2147483647, %v581
        %v590 = vand.u32 2147483647, %v582
        %v591 = vand.u32 2147483647, %v583
        %v592 = vadd.f32 %v568, %v584
        %v593 = vadd.f32 %v569, %v585
        %v594 = vadd.f32 %v570, %v586
        %v595 = vadd.f32 %v571, %v587
        %v596 = vadd.f32 %v572, %v588
        %v597 = vadd.f32 %v573, %v589
        %v598 = vadd.f32 %v574, %v590
        %v599 = vadd.f32 %v575, %v591
        %v600 = vsub.f32 %v237, %v528
        %v601 = vsub.f32 %v238, %v529
        %v602 = vsub.f32 %v239, %v530
        %v603 = vsub.f32 %v240, %v531
        %v604 = vsub.f32 %v241, %v532
        %v605 = vsub.f32 %v242, %v533
        %v606 = vsub.f32 %v243, %v534
        %v607 = vsub.f32 %v244, %v535
        %v608 = vand.u32 2147483647, %v600
        %v609 = vand.u32 2147483647, %v601
        %v610 = vand.u32 2147483647, %v602
        %v611 = vand.u32 2147483647, %v603
        %v612 = vand.u32 2147483647, %v604
        %v613 = vand.u32 2147483647, %v605
        %v614 = vand.u32 2147483647, %v606
        %v615 = vand.u32 2147483647, %v607
        %v616 = vadd.f32 %v592, %v608
        %v617 = vadd.f32 %v593, %v609
        %v618 = vadd.f32 %v594, %v610
        %v619 = vadd.f32 %v595, %v611
        %v620 = vadd.f32 %v596, %v612
        %v621 = vadd.f32 %v597, %v613
        %v622 = vadd.f32 %v598, %v614
        %v623 = vadd.f32 %v599, %v615
        %v624 = vsub.f32 %v310, %v528
        %v625 = vsub.f32 %v311, %v529
        %v626 = vsub.f32 %v312, %v530
        %v627 = vsub.f32 %v313, %v531
        %v628 = vsub.f32 %v314, %v532
        %v629 = vsub.f32 %v315, %v533
        %v630 = vsub.f32 %v316, %v534
        %v631 = vsub.f32 %v317, %v535
        %v632 = vand.u32 2147483647, %v624
        %v633 = vand.u32 2147483647, %v625
        %v634 = vand.u32 2147483647, %v626
        %v635 = vand.u32 2147483647, %v627
        %v636 = vand.u32 2147483647, %v628
        %v637 = vand.u32 2147483647, %v629
        %v638 = vand.u32 2147483647, %v630
        %v639 = vand.u32 2147483647, %v631
        %v640 = vadd.f32 %v616, %v632
        %v641 = vadd.f32 %v617, %v633
        %v642 = vadd.f32 %v618, %v634
        %v643 = vadd.f32 %v619, %v635
        %v644 = vadd.f32 %v620, %v636
        %v645 = vadd.f32 %v621, %v637
        %v646 = vadd.f32 %v622, %v638
        %v647 = vadd.f32 %v623, %v639
        %v648 = vsub.f32 %v407, %v528
        %v649 = vsub.f32 %v408, %v529
        %v650 = vsub.f32 %v409, %v530
        %v651 = vsub.f32 %v410, %v531
        %v652 = vsub.f32 %v411, %v532
        %v653 = vsub.f32 %v412, %v533
        %v654 = vsub.f32 %v413, %v534
        %v655 = vsub.f32 %v414, %v535
        %v656 = vand.u32 2147483647, %v648
        %v657 = vand.u32 2147483647, %v649
        %v658 = vand.u32 2147483647, %v650
        %v659 = vand.u32 2147483647, %v651
        %v660 = vand.u32 2147483647, %v652
        %v661 = vand.u32 2147483647, %v653
        %v662 = vand.u32 2147483647, %v654
        %v663 = vand.u32 2147483647, %v655
        %v664 = vadd.f32 %v640, %v656
        %v665 = vadd.f32 %v641, %v657
        %v666 = vadd.f32 %v642, %v658
        %v667 = vadd.f32 %v643, %v659
        %v668 = vadd.f32 %v644, %v660
        %v669 = vadd.f32 %v645, %v661
        %v670 = vadd.f32 %v646, %v662
        %v671 = vadd.f32 %v647, %v663
        %s672 = scalar_lea.vmem %s152, 384 [#allocation2]
        %v673 = vld [vmem:[%s672] sm:$0xff]
        %v674 = vld [vmem:[%s672 + $0x8] sm:$0xff]
        %v675 = vld [vmem:[%s672 + $0x10] sm:$0xff]
        %v676 = vld [vmem:[%s672 + $0x18] sm:$0xff]
        %v677 = vld [vmem:[%s672 + $0x20] sm:$0xff]
        %v678 = vld [vmem:[%s672 + $0x28] sm:$0xff]
        %v679 = vld [vmem:[%s672 + $0x30] sm:$0xff]
        %v680 = vld [vmem:[%s672 + $0x38] sm:$0xff]
        %v681 = vmax.f32 %v536, %v673
        %v682 = vmax.f32 %v537, %v674
        %v683 = vmax.f32 %v538, %v675
        %v684 = vmax.f32 %v539, %v676
        %v685 = vmax.f32 %v540, %v677
        %v686 = vmax.f32 %v541, %v678
        %v687 = vmax.f32 %v542, %v679
        %v688 = vmax.f32 %v543, %v680
        %v689 = vmin.f32 %v544, %v673
        %v690 = vmin.f32 %v545, %v674
        %v691 = vmin.f32 %v546, %v675
        %v692 = vmin.f32 %v547, %v676
        %v693 = vmin.f32 %v548, %v677
        %v694 = vmin.f32 %v549, %v678
        %v695 = vmin.f32 %v550, %v679
        %v696 = vmin.f32 %v551, %v680
        %v697 = vsub.f32 %v179, %v673
        %v698 = vsub.f32 %v180, %v674
        %v699 = vsub.f32 %v181, %v675
        %v700 = vsub.f32 %v182, %v676
        %v701 = vsub.f32 %v183, %v677
        %v702 = vsub.f32 %v184, %v678
        %v703 = vsub.f32 %v185, %v679
        %v704 = vsub.f32 %v186, %v680
        %v705 = vand.u32 2147483647, %v697
        %v706 = vand.u32 2147483647, %v698
        %v707 = vand.u32 2147483647, %v699
        %v708 = vand.u32 2147483647, %v700
        %v709 = vand.u32 2147483647, %v701
        %v710 = vand.u32 2147483647, %v702
        %v711 = vand.u32 2147483647, %v703
        %v712 = vand.u32 2147483647, %v704
        %v713 = vadd.f32 %v664, %v705
        %v714 = vadd.f32 %v665, %v706
        %v715 = vadd.f32 %v666, %v707
        %v716 = vadd.f32 %v667, %v708
        %v717 = vadd.f32 %v668, %v709
        %v718 = vadd.f32 %v669, %v710
        %v719 = vadd.f32 %v670, %v711
        %v720 = vadd.f32 %v671, %v712
        %v721 = vsub.f32 %v188, %v673
        %v722 = vsub.f32 %v189, %v674
        %v723 = vsub.f32 %v190, %v675
        %v724 = vsub.f32 %v191, %v676
        %v725 = vsub.f32 %v192, %v677
        %v726 = vsub.f32 %v193, %v678
        %v727 = vsub.f32 %v194, %v679
        %v728 = vsub.f32 %v195, %v680
        %v729 = vand.u32 2147483647, %v721
        %v730 = vand.u32 2147483647, %v722
        %v731 = vand.u32 2147483647, %v723
        %v732 = vand.u32 2147483647, %v724
        %v733 = vand.u32 2147483647, %v725
        %v734 = vand.u32 2147483647, %v726
        %v735 = vand.u32 2147483647, %v727
        %v736 = vand.u32 2147483647, %v728
        %v737 = vadd.f32 %v713, %v729
        %v738 = vadd.f32 %v714, %v730
        %v739 = vadd.f32 %v715, %v731
        %v740 = vadd.f32 %v716, %v732
        %v741 = vadd.f32 %v717, %v733
        %v742 = vadd.f32 %v718, %v734
        %v743 = vadd.f32 %v719, %v735
        %v744 = vadd.f32 %v720, %v736
        %v745 = vsub.f32 %v237, %v673
        %v746 = vsub.f32 %v238, %v674
        %v747 = vsub.f32 %v239, %v675
        %v748 = vsub.f32 %v240, %v676
        %v749 = vsub.f32 %v241, %v677
        %v750 = vsub.f32 %v242, %v678
        %v751 = vsub.f32 %v243, %v679
        %v752 = vsub.f32 %v244, %v680
        %v753 = vand.u32 2147483647, %v745
        %v754 = vand.u32 2147483647, %v746
        %v755 = vand.u32 2147483647, %v747
        %v756 = vand.u32 2147483647, %v748
        %v757 = vand.u32 2147483647, %v749
        %v758 = vand.u32 2147483647, %v750
        %v759 = vand.u32 2147483647, %v751
        %v760 = vand.u32 2147483647, %v752
        %v761 = vadd.f32 %v737, %v753
        %v762 = vadd.f32 %v738, %v754
        %v763 = vadd.f32 %v739, %v755
        %v764 = vadd.f32 %v740, %v756
        %v765 = vadd.f32 %v741, %v757
        %v766 = vadd.f32 %v742, %v758
        %v767 = vadd.f32 %v743, %v759
        %v768 = vadd.f32 %v744, %v760
        %v769 = vsub.f32 %v310, %v673
        %v770 = vsub.f32 %v311, %v674
        %v771 = vsub.f32 %v312, %v675
        %v772 = vsub.f32 %v313, %v676
        %v773 = vsub.f32 %v314, %v677
        %v774 = vsub.f32 %v315, %v678
        %v775 = vsub.f32 %v316, %v679
        %v776 = vsub.f32 %v317, %v680
        %v777 = vand.u32 2147483647, %v769
        %v778 = vand.u32 2147483647, %v770
        %v779 = vand.u32 2147483647, %v771
        %v780 = vand.u32 2147483647, %v772
        %v781 = vand.u32 2147483647, %v773
        %v782 = vand.u32 2147483647, %v774
        %v783 = vand.u32 2147483647, %v775
        %v784 = vand.u32 2147483647, %v776
        %v785 = vadd.f32 %v761, %v777
        %v786 = vadd.f32 %v762, %v778
        %v787 = vadd.f32 %v763, %v779
        %v788 = vadd.f32 %v764, %v780
        %v789 = vadd.f32 %v765, %v781
        %v790 = vadd.f32 %v766, %v782
        %v791 = vadd.f32 %v767, %v783
        %v792 = vadd.f32 %v768, %v784
        %v793 = vsub.f32 %v407, %v673
        %v794 = vsub.f32 %v408, %v674
        %v795 = vsub.f32 %v409, %v675
        %v796 = vsub.f32 %v410, %v676
        %v797 = vsub.f32 %v411, %v677
        %v798 = vsub.f32 %v412, %v678
        %v799 = vsub.f32 %v413, %v679
        %v800 = vsub.f32 %v414, %v680
        %v801 = vand.u32 2147483647, %v793
        %v802 = vand.u32 2147483647, %v794
        %v803 = vand.u32 2147483647, %v795
        %v804 = vand.u32 2147483647, %v796
        %v805 = vand.u32 2147483647, %v797
        %v806 = vand.u32 2147483647, %v798
        %v807 = vand.u32 2147483647, %v799
        %v808 = vand.u32 2147483647, %v800
        %v809 = vadd.f32 %v785, %v801
        %v810 = vadd.f32 %v786, %v802
        %v811 = vadd.f32 %v787, %v803
        %v812 = vadd.f32 %v788, %v804
        %v813 = vadd.f32 %v789, %v805
        %v814 = vadd.f32 %v790, %v806
        %v815 = vadd.f32 %v791, %v807
        %v816 = vadd.f32 %v792, %v808
        %v817 = vsub.f32 %v528, %v673
        %v818 = vsub.f32 %v529, %v674
        %v819 = vsub.f32 %v530, %v675
        %v820 = vsub.f32 %v531, %v676
        %v821 = vsub.f32 %v532, %v677
        %v822 = vsub.f32 %v533, %v678
        %v823 = vsub.f32 %v534, %v679
        %v824 = vsub.f32 %v535, %v680
        %v825 = vand.u32 2147483647, %v817
        %v826 = vand.u32 2147483647, %v818
        %v827 = vand.u32 2147483647, %v819
        %v828 = vand.u32 2147483647, %v820
        %v829 = vand.u32 2147483647, %v821
        %v830 = vand.u32 2147483647, %v822
        %v831 = vand.u32 2147483647, %v823
        %v832 = vand.u32 2147483647, %v824
        %v833 = vadd.f32 %v809, %v825
        %v834 = vadd.f32 %v810, %v826
        %v835 = vadd.f32 %v811, %v827
        %v836 = vadd.f32 %v812, %v828
        %v837 = vadd.f32 %v813, %v829
        %v838 = vadd.f32 %v814, %v830
        %v839 = vadd.f32 %v815, %v831
        %v840 = vadd.f32 %v816, %v832
        %s841 = scalar_lea.vmem %s152, 448 [#allocation2]
        %v842 = vld [vmem:[%s841] sm:$0xff]
        %v843 = vld [vmem:[%s841 + $0x8] sm:$0xff]
        %v844 = vld [vmem:[%s841 + $0x10] sm:$0xff]
        %v845 = vld [vmem:[%s841 + $0x18] sm:$0xff]
        %v846 = vld [vmem:[%s841 + $0x20] sm:$0xff]
        %v847 = vld [vmem:[%s841 + $0x28] sm:$0xff]
        %v848 = vld [vmem:[%s841 + $0x30] sm:$0xff]
        %v849 = vld [vmem:[%s841 + $0x38] sm:$0xff]
        %v850 = vmax.f32 %v681, %v842
        %v851 = vmax.f32 %v682, %v843
        %v852 = vmax.f32 %v683, %v844
        %v853 = vmax.f32 %v684, %v845
        %v854 = vmax.f32 %v685, %v846
        %v855 = vmax.f32 %v686, %v847
        %v856 = vmax.f32 %v687, %v848
        %v857 = vmax.f32 %v688, %v849
        %v858 = vmin.f32 %v689, %v842
        %v859 = vmin.f32 %v690, %v843
        %v860 = vmin.f32 %v691, %v844
        %v861 = vmin.f32 %v692, %v845
        %v862 = vmin.f32 %v693, %v846
        %v863 = vmin.f32 %v694, %v847
        %v864 = vmin.f32 %v695, %v848
        %v865 = vmin.f32 %v696, %v849
        %v866 = vsub.f32 %v179, %v842
        %v867 = vsub.f32 %v180, %v843
        %v868 = vsub.f32 %v181, %v844
        %v869 = vsub.f32 %v182, %v845
        %v870 = vsub.f32 %v183, %v846
        %v871 = vsub.f32 %v184, %v847
        %v872 = vsub.f32 %v185, %v848
        %v873 = vsub.f32 %v186, %v849
        %v874 = vand.u32 2147483647, %v866
        %v875 = vand.u32 2147483647, %v867
        %v876 = vand.u32 2147483647, %v868
        %v877 = vand.u32 2147483647, %v869
        %v878 = vand.u32 2147483647, %v870
        %v879 = vand.u32 2147483647, %v871
        %v880 = vand.u32 2147483647, %v872
        %v881 = vand.u32 2147483647, %v873
        %v882 = vadd.f32 %v833, %v874
        %v883 = vadd.f32 %v834, %v875
        %v884 = vadd.f32 %v835, %v876
        %v885 = vadd.f32 %v836, %v877
        %v886 = vadd.f32 %v837, %v878
        %v887 = vadd.f32 %v838, %v879
        %v888 = vadd.f32 %v839, %v880
        %v889 = vadd.f32 %v840, %v881
        %v890 = vsub.f32 %v188, %v842
        %v891 = vsub.f32 %v189, %v843
        %v892 = vsub.f32 %v190, %v844
        %v893 = vsub.f32 %v191, %v845
        %v894 = vsub.f32 %v192, %v846
        %v895 = vsub.f32 %v193, %v847
        %v896 = vsub.f32 %v194, %v848
        %v897 = vsub.f32 %v195, %v849
        %v898 = vand.u32 2147483647, %v890
        %v899 = vand.u32 2147483647, %v891
        %v900 = vand.u32 2147483647, %v892
        %v901 = vand.u32 2147483647, %v893
        %v902 = vand.u32 2147483647, %v894
        %v903 = vand.u32 2147483647, %v895
        %v904 = vand.u32 2147483647, %v896
        %v905 = vand.u32 2147483647, %v897
        %v906 = vadd.f32 %v882, %v898
        %v907 = vadd.f32 %v883, %v899
        %v908 = vadd.f32 %v884, %v900
        %v909 = vadd.f32 %v885, %v901
        %v910 = vadd.f32 %v886, %v902
        %v911 = vadd.f32 %v887, %v903
        %v912 = vadd.f32 %v888, %v904
        %v913 = vadd.f32 %v889, %v905
        %v914 = vsub.f32 %v237, %v842
        %v915 = vsub.f32 %v238, %v843
        %v916 = vsub.f32 %v239, %v844
        %v917 = vsub.f32 %v240, %v845
        %v918 = vsub.f32 %v241, %v846
        %v919 = vsub.f32 %v242, %v847
        %v920 = vsub.f32 %v243, %v848
        %v921 = vsub.f32 %v244, %v849
        %v922 = vand.u32 2147483647, %v914
        %v923 = vand.u32 2147483647, %v915
        %v924 = vand.u32 2147483647, %v916
        %v925 = vand.u32 2147483647, %v917
        %v926 = vand.u32 2147483647, %v918
        %v927 = vand.u32 2147483647, %v919
        %v928 = vand.u32 2147483647, %v920
        %v929 = vand.u32 2147483647, %v921
        %v930 = vadd.f32 %v906, %v922
        %v931 = vadd.f32 %v907, %v923
        %v932 = vadd.f32 %v908, %v924
        %v933 = vadd.f32 %v909, %v925
        %v934 = vadd.f32 %v910, %v926
        %v935 = vadd.f32 %v911, %v927
        %v936 = vadd.f32 %v912, %v928
        %v937 = vadd.f32 %v913, %v929
        %v938 = vsub.f32 %v310, %v842
        %v939 = vsub.f32 %v311, %v843
        %v940 = vsub.f32 %v312, %v844
        %v941 = vsub.f32 %v313, %v845
        %v942 = vsub.f32 %v314, %v846
        %v943 = vsub.f32 %v315, %v847
        %v944 = vsub.f32 %v316, %v848
        %v945 = vsub.f32 %v317, %v849
        %v946 = vand.u32 2147483647, %v938
        %v947 = vand.u32 2147483647, %v939
        %v948 = vand.u32 2147483647, %v940
        %v949 = vand.u32 2147483647, %v941
        %v950 = vand.u32 2147483647, %v942
        %v951 = vand.u32 2147483647, %v943
        %v952 = vand.u32 2147483647, %v944
        %v953 = vand.u32 2147483647, %v945
        %v954 = vadd.f32 %v930, %v946
        %v955 = vadd.f32 %v931, %v947
        %v956 = vadd.f32 %v932, %v948
        %v957 = vadd.f32 %v933, %v949
        %v958 = vadd.f32 %v934, %v950
        %v959 = vadd.f32 %v935, %v951
        %v960 = vadd.f32 %v936, %v952
        %v961 = vadd.f32 %v937, %v953
        %v962 = vsub.f32 %v407, %v842
        %v963 = vsub.f32 %v408, %v843
        %v964 = vsub.f32 %v409, %v844
        %v965 = vsub.f32 %v410, %v845
        %v966 = vsub.f32 %v411, %v846
        %v967 = vsub.f32 %v412, %v847
        %v968 = vsub.f32 %v413, %v848
        %v969 = vsub.f32 %v414, %v849
        %v970 = vand.u32 2147483647, %v962
        %v971 = vand.u32 2147483647, %v963
        %v972 = vand.u32 2147483647, %v964
        %v973 = vand.u32 2147483647, %v965
        %v974 = vand.u32 2147483647, %v966
        %v975 = vand.u32 2147483647, %v967
        %v976 = vand.u32 2147483647, %v968
        %v977 = vand.u32 2147483647, %v969
        %v978 = vadd.f32 %v954, %v970
        %v979 = vadd.f32 %v955, %v971
        %v980 = vadd.f32 %v956, %v972
        %v981 = vadd.f32 %v957, %v973
        %v982 = vadd.f32 %v958, %v974
        %v983 = vadd.f32 %v959, %v975
        %v984 = vadd.f32 %v960, %v976
        %v985 = vadd.f32 %v961, %v977
        %v986 = vsub.f32 %v528, %v842
        %v987 = vsub.f32 %v529, %v843
        %v988 = vsub.f32 %v530, %v844
        %v989 = vsub.f32 %v531, %v845
        %v990 = vsub.f32 %v532, %v846
        %v991 = vsub.f32 %v533, %v847
        %v992 = vsub.f32 %v534, %v848
        %v993 = vsub.f32 %v535, %v849
        %v994 = vand.u32 2147483647, %v986
        %v995 = vand.u32 2147483647, %v987
        %v996 = vand.u32 2147483647, %v988
        %v997 = vand.u32 2147483647, %v989
        %v998 = vand.u32 2147483647, %v990
        %v999 = vand.u32 2147483647, %v991
        %v1000 = vand.u32 2147483647, %v992
        %v1001 = vand.u32 2147483647, %v993
        %v1002 = vadd.f32 %v978, %v994
        %v1003 = vadd.f32 %v979, %v995
        %v1004 = vadd.f32 %v980, %v996
        %v1005 = vadd.f32 %v981, %v997
        %v1006 = vadd.f32 %v982, %v998
        %v1007 = vadd.f32 %v983, %v999
        %v1008 = vadd.f32 %v984, %v1000
        %v1009 = vadd.f32 %v985, %v1001
        %v1010 = vsub.f32 %v673, %v842
        %v1011 = vsub.f32 %v674, %v843
        %v1012 = vsub.f32 %v675, %v844
        %v1013 = vsub.f32 %v676, %v845
        %v1014 = vsub.f32 %v677, %v846
        %v1015 = vsub.f32 %v678, %v847
        %v1016 = vsub.f32 %v679, %v848
        %v1017 = vsub.f32 %v680, %v849
        %v1018 = vand.u32 2147483647, %v1010
        %v1019 = vand.u32 2147483647, %v1011
        %v1020 = vand.u32 2147483647, %v1012
        %v1021 = vand.u32 2147483647, %v1013
        %v1022 = vand.u32 2147483647, %v1014
        %v1023 = vand.u32 2147483647, %v1015
        %v1024 = vand.u32 2147483647, %v1016
        %v1025 = vand.u32 2147483647, %v1017
        %v1026 = vadd.f32 %v1002, %v1018
        %v1027 = vadd.f32 %v1003, %v1019
        %v1028 = vadd.f32 %v1004, %v1020
        %v1029 = vadd.f32 %v1005, %v1021
        %v1030 = vadd.f32 %v1006, %v1022
        %v1031 = vadd.f32 %v1007, %v1023
        %v1032 = vadd.f32 %v1008, %v1024
        %v1033 = vadd.f32 %v1009, %v1025
        %v1034 = vmul.f32 %v1026, 0.03125
        %v1035 = vmul.f32 %v1027, 0.03125
        %v1036 = vmul.f32 %v1028, 0.03125
        %v1037 = vmul.f32 %v1029, 0.03125
        %v1038 = vmul.f32 %v1030, 0.03125
        %v1039 = vmul.f32 %v1031, 0.03125
        %v1040 = vmul.f32 %v1032, 0.03125
        %v1041 = vmul.f32 %v1033, 0.03125
        %v1042 = vsub.f32 %v179, %v850
        %v1043 = vsub.f32 %v180, %v851
        %v1044 = vsub.f32 %v181, %v852
        %v1045 = vsub.f32 %v182, %v853
        %v1046 = vsub.f32 %v183, %v854
        %v1047 = vsub.f32 %v184, %v855
        %v1048 = vsub.f32 %v185, %v856
        %v1049 = vsub.f32 %v186, %v857
        %v1050 = vmul.f32 %v1042, 5.0
        %v1051 = vmul.f32 %v1043, 5.0
        %v1052 = vmul.f32 %v1044, 5.0
        %v1053 = vmul.f32 %v1045, 5.0
        %v1054 = vmul.f32 %v1046, 5.0
        %v1055 = vmul.f32 %v1047, 5.0
        %v1056 = vmul.f32 %v1048, 5.0
        %v1057 = vmul.f32 %v1049, 5.0
        %v1058 = vmul.f32 %v1050, 1.442695
        %v1059 = vpow.pop %v1058
        %v1060 = vmul.f32 %v1051, 1.442695
        %v1061 = vpow.pop %v1060
        %v1062 = vmul.f32 %v1052, 1.442695
        %v1063 = vpow.pop %v1062
        %v1064 = vmul.f32 %v1053, 1.442695
        %v1065 = vpow.pop %v1064
        %v1066 = vmul.f32 %v1054, 1.442695
        %v1067 = vpow.pop %v1066
        %v1068 = vmul.f32 %v1055, 1.442695
        %v1069 = vpow.pop %v1068
        %v1070 = vmul.f32 %v1056, 1.442695
        %v1071 = vpow.pop %v1070
        %v1072 = vmul.f32 %v1057, 1.442695
        %v1073 = vpow.pop %v1072
        %v1074 = vadd.f32 %v1059, 0.0
        %v1075 = vadd.f32 %v1061, 0.0
        %v1076 = vadd.f32 %v1063, 0.0
        %v1077 = vadd.f32 %v1065, 0.0
        %v1078 = vadd.f32 %v1067, 0.0
        %v1079 = vadd.f32 %v1069, 0.0
        %v1080 = vadd.f32 %v1071, 0.0
        %v1081 = vadd.f32 %v1073, 0.0
        %v1082 = vsub.f32 %v858, %v179
        %v1083 = vsub.f32 %v859, %v180
        %v1084 = vsub.f32 %v860, %v181
        %v1085 = vsub.f32 %v861, %v182
        %v1086 = vsub.f32 %v862, %v183
        %v1087 = vsub.f32 %v863, %v184
        %v1088 = vsub.f32 %v864, %v185
        %v1089 = vsub.f32 %v865, %v186
        %v1090 = vmul.f32 %v1082, 5.0
        %v1091 = vmul.f32 %v1083, 5.0
        %v1092 = vmul.f32 %v1084, 5.0
        %v1093 = vmul.f32 %v1085, 5.0
        %v1094 = vmul.f32 %v1086, 5.0
        %v1095 = vmul.f32 %v1087, 5.0
        %v1096 = vmul.f32 %v1088, 5.0
        %v1097 = vmul.f32 %v1089, 5.0
        %v1098 = vmul.f32 %v1090, 1.442695
        %v1099 = vpow.pop %v1098
        %v1100 = vmul.f32 %v1091, 1.442695
        %v1101 = vpow.pop %v1100
        %v1102 = vmul.f32 %v1092, 1.442695
        %v1103 = vpow.pop %v1102
        %v1104 = vmul.f32 %v1093, 1.442695
        %v1105 = vpow.pop %v1104
        %v1106 = vmul.f32 %v1094, 1.442695
        %v1107 = vpow.pop %v1106
        %v1108 = vmul.f32 %v1095, 1.442695
        %v1109 = vpow.pop %v1108
        %v1110 = vmul.f32 %v1096, 1.442695
        %v1111 = vpow.pop %v1110
        %v1112 = vmul.f32 %v1097, 1.442695
        %v1113 = vpow.pop %v1112
        %v1114 = vadd.f32 %v1099, 0.0
        %v1115 = vadd.f32 %v1101, 0.0
        %v1116 = vadd.f32 %v1103, 0.0
        %v1117 = vadd.f32 %v1105, 0.0
        %v1118 = vadd.f32 %v1107, 0.0
        %v1119 = vadd.f32 %v1109, 0.0
        %v1120 = vadd.f32 %v1111, 0.0
        %v1121 = vadd.f32 %v1113, 0.0
        %v1122 = vsub.f32 %v188, %v850
        %v1123 = vsub.f32 %v189, %v851
        %v1124 = vsub.f32 %v190, %v852
        %v1125 = vsub.f32 %v191, %v853
        %v1126 = vsub.f32 %v192, %v854
        %v1127 = vsub.f32 %v193, %v855
        %v1128 = vsub.f32 %v194, %v856
        %v1129 = vsub.f32 %v195, %v857
        %v1130 = vmul.f32 %v1122, 5.0
        %v1131 = vmul.f32 %v1123, 5.0
        %v1132 = vmul.f32 %v1124, 5.0
        %v1133 = vmul.f32 %v1125, 5.0
        %v1134 = vmul.f32 %v1126, 5.0
        %v1135 = vmul.f32 %v1127, 5.0
        %v1136 = vmul.f32 %v1128, 5.0
        %v1137 = vmul.f32 %v1129, 5.0
        %v1138 = vmul.f32 %v1130, 1.442695
        %v1139 = vpow.pop %v1138
        %v1140 = vmul.f32 %v1131, 1.442695
        %v1141 = vpow.pop %v1140
        %v1142 = vmul.f32 %v1132, 1.442695
        %v1143 = vpow.pop %v1142
        %v1144 = vmul.f32 %v1133, 1.442695
        %v1145 = vpow.pop %v1144
        %v1146 = vmul.f32 %v1134, 1.442695
        %v1147 = vpow.pop %v1146
        %v1148 = vmul.f32 %v1135, 1.442695
        %v1149 = vpow.pop %v1148
        %v1150 = vmul.f32 %v1136, 1.442695
        %v1151 = vpow.pop %v1150
        %v1152 = vmul.f32 %v1137, 1.442695
        %v1153 = vpow.pop %v1152
        %v1154 = vadd.f32 %v1074, %v1139
        %v1155 = vadd.f32 %v1075, %v1141
        %v1156 = vadd.f32 %v1076, %v1143
        %v1157 = vadd.f32 %v1077, %v1145
        %v1158 = vadd.f32 %v1078, %v1147
        %v1159 = vadd.f32 %v1079, %v1149
        %v1160 = vadd.f32 %v1080, %v1151
        %v1161 = vadd.f32 %v1081, %v1153
        %v1162 = vsub.f32 %v858, %v188
        %v1163 = vsub.f32 %v859, %v189
        %v1164 = vsub.f32 %v860, %v190
        %v1165 = vsub.f32 %v861, %v191
        %v1166 = vsub.f32 %v862, %v192
        %v1167 = vsub.f32 %v863, %v193
        %v1168 = vsub.f32 %v864, %v194
        %v1169 = vsub.f32 %v865, %v195
        %v1170 = vmul.f32 %v1162, 5.0
        %v1171 = vmul.f32 %v1163, 5.0
        %v1172 = vmul.f32 %v1164, 5.0
        %v1173 = vmul.f32 %v1165, 5.0
        %v1174 = vmul.f32 %v1166, 5.0
        %v1175 = vmul.f32 %v1167, 5.0
        %v1176 = vmul.f32 %v1168, 5.0
        %v1177 = vmul.f32 %v1169, 5.0
        %v1178 = vmul.f32 %v1170, 1.442695
        %v1179 = vpow.pop %v1178
        %v1180 = vmul.f32 %v1171, 1.442695
        %v1181 = vpow.pop %v1180
        %v1182 = vmul.f32 %v1172, 1.442695
        %v1183 = vpow.pop %v1182
        %v1184 = vmul.f32 %v1173, 1.442695
        %v1185 = vpow.pop %v1184
        %v1186 = vmul.f32 %v1174, 1.442695
        %v1187 = vpow.pop %v1186
        %v1188 = vmul.f32 %v1175, 1.442695
        %v1189 = vpow.pop %v1188
        %v1190 = vmul.f32 %v1176, 1.442695
        %v1191 = vpow.pop %v1190
        %v1192 = vmul.f32 %v1177, 1.442695
        %v1193 = vpow.pop %v1192
        %v1194 = vadd.f32 %v1114, %v1179
        %v1195 = vadd.f32 %v1115, %v1181
        %v1196 = vadd.f32 %v1116, %v1183
        %v1197 = vadd.f32 %v1117, %v1185
        %v1198 = vadd.f32 %v1118, %v1187
        %v1199 = vadd.f32 %v1119, %v1189
        %v1200 = vadd.f32 %v1120, %v1191
        %v1201 = vadd.f32 %v1121, %v1193
        %v1202 = vsub.f32 %v237, %v850
        %v1203 = vsub.f32 %v238, %v851
        %v1204 = vsub.f32 %v239, %v852
        %v1205 = vsub.f32 %v240, %v853
        %v1206 = vsub.f32 %v241, %v854
        %v1207 = vsub.f32 %v242, %v855
        %v1208 = vsub.f32 %v243, %v856
        %v1209 = vsub.f32 %v244, %v857
        %v1210 = vmul.f32 %v1202, 5.0
        %v1211 = vmul.f32 %v1203, 5.0
        %v1212 = vmul.f32 %v1204, 5.0
        %v1213 = vmul.f32 %v1205, 5.0
        %v1214 = vmul.f32 %v1206, 5.0
        %v1215 = vmul.f32 %v1207, 5.0
        %v1216 = vmul.f32 %v1208, 5.0
        %v1217 = vmul.f32 %v1209, 5.0
        %v1218 = vmul.f32 %v1210, 1.442695
        %v1219 = vpow.pop %v1218
        %v1220 = vmul.f32 %v1211, 1.442695
        %v1221 = vpow.pop %v1220
        %v1222 = vmul.f32 %v1212, 1.442695
        %v1223 = vpow.pop %v1222
        %v1224 = vmul.f32 %v1213, 1.442695
        %v1225 = vpow.pop %v1224
        %v1226 = vmul.f32 %v1214, 1.442695
        %v1227 = vpow.pop %v1226
        %v1228 = vmul.f32 %v1215, 1.442695
        %v1229 = vpow.pop %v1228
        %v1230 = vmul.f32 %v1216, 1.442695
        %v1231 = vpow.pop %v1230
        %v1232 = vmul.f32 %v1217, 1.442695
        %v1233 = vpow.pop %v1232
        %v1234 = vadd.f32 %v1154, %v1219
        %v1235 = vadd.f32 %v1155, %v1221
        %v1236 = vadd.f32 %v1156, %v1223
        %v1237 = vadd.f32 %v1157, %v1225
        %v1238 = vadd.f32 %v1158, %v1227
        %v1239 = vadd.f32 %v1159, %v1229
        %v1240 = vadd.f32 %v1160, %v1231
        %v1241 = vadd.f32 %v1161, %v1233
        %v1242 = vsub.f32 %v858, %v237
        %v1243 = vsub.f32 %v859, %v238
        %v1244 = vsub.f32 %v860, %v239
        %v1245 = vsub.f32 %v861, %v240
        %v1246 = vsub.f32 %v862, %v241
        %v1247 = vsub.f32 %v863, %v242
        %v1248 = vsub.f32 %v864, %v243
        %v1249 = vsub.f32 %v865, %v244
        %v1250 = vmul.f32 %v1242, 5.0
        %v1251 = vmul.f32 %v1243, 5.0
        %v1252 = vmul.f32 %v1244, 5.0
        %v1253 = vmul.f32 %v1245, 5.0
        %v1254 = vmul.f32 %v1246, 5.0
        %v1255 = vmul.f32 %v1247, 5.0
        %v1256 = vmul.f32 %v1248, 5.0
        %v1257 = vmul.f32 %v1249, 5.0
        %v1258 = vmul.f32 %v1250, 1.442695
        %v1259 = vpow.pop %v1258
        %v1260 = vmul.f32 %v1251, 1.442695
        %v1261 = vpow.pop %v1260
        %v1262 = vmul.f32 %v1252, 1.442695
        %v1263 = vpow.pop %v1262
        %v1264 = vmul.f32 %v1253, 1.442695
        %v1265 = vpow.pop %v1264
        %v1266 = vmul.f32 %v1254, 1.442695
        %v1267 = vpow.pop %v1266
        %v1268 = vmul.f32 %v1255, 1.442695
        %v1269 = vpow.pop %v1268
        %v1270 = vmul.f32 %v1256, 1.442695
        %v1271 = vpow.pop %v1270
        %v1272 = vmul.f32 %v1257, 1.442695
        %v1273 = vpow.pop %v1272
        %v1274 = vadd.f32 %v1194, %v1259
        %v1275 = vadd.f32 %v1195, %v1261
        %v1276 = vadd.f32 %v1196, %v1263
        %v1277 = vadd.f32 %v1197, %v1265
        %v1278 = vadd.f32 %v1198, %v1267
        %v1279 = vadd.f32 %v1199, %v1269
        %v1280 = vadd.f32 %v1200, %v1271
        %v1281 = vadd.f32 %v1201, %v1273
        %v1282 = vsub.f32 %v310, %v850
        %v1283 = vsub.f32 %v311, %v851
        %v1284 = vsub.f32 %v312, %v852
        %v1285 = vsub.f32 %v313, %v853
        %v1286 = vsub.f32 %v314, %v854
        %v1287 = vsub.f32 %v315, %v855
        %v1288 = vsub.f32 %v316, %v856
        %v1289 = vsub.f32 %v317, %v857
        %v1290 = vmul.f32 %v1282, 5.0
        %v1291 = vmul.f32 %v1283, 5.0
        %v1292 = vmul.f32 %v1284, 5.0
        %v1293 = vmul.f32 %v1285, 5.0
        %v1294 = vmul.f32 %v1286, 5.0
        %v1295 = vmul.f32 %v1287, 5.0
        %v1296 = vmul.f32 %v1288, 5.0
        %v1297 = vmul.f32 %v1289, 5.0
        %v1298 = vmul.f32 %v1290, 1.442695
        %v1299 = vpow.pop %v1298
        %v1300 = vmul.f32 %v1291, 1.442695
        %v1301 = vpow.pop %v1300
        %v1302 = vmul.f32 %v1292, 1.442695
        %v1303 = vpow.pop %v1302
        %v1304 = vmul.f32 %v1293, 1.442695
        %v1305 = vpow.pop %v1304
        %v1306 = vmul.f32 %v1294, 1.442695
        %v1307 = vpow.pop %v1306
        %v1308 = vmul.f32 %v1295, 1.442695
        %v1309 = vpow.pop %v1308
        %v1310 = vmul.f32 %v1296, 1.442695
        %v1311 = vpow.pop %v1310
        %v1312 = vmul.f32 %v1297, 1.442695
        %v1313 = vpow.pop %v1312
        %v1314 = vadd.f32 %v1234, %v1299
        %v1315 = vadd.f32 %v1235, %v1301
        %v1316 = vadd.f32 %v1236, %v1303
        %v1317 = vadd.f32 %v1237, %v1305
        %v1318 = vadd.f32 %v1238, %v1307
        %v1319 = vadd.f32 %v1239, %v1309
        %v1320 = vadd.f32 %v1240, %v1311
        %v1321 = vadd.f32 %v1241, %v1313
        %v1322 = vsub.f32 %v858, %v310
        %v1323 = vsub.f32 %v859, %v311
        %v1324 = vsub.f32 %v860, %v312
        %v1325 = vsub.f32 %v861, %v313
        %v1326 = vsub.f32 %v862, %v314
        %v1327 = vsub.f32 %v863, %v315
        %v1328 = vsub.f32 %v864, %v316
        %v1329 = vsub.f32 %v865, %v317
        %v1330 = vmul.f32 %v1322, 5.0
        %v1331 = vmul.f32 %v1323, 5.0
        %v1332 = vmul.f32 %v1324, 5.0
        %v1333 = vmul.f32 %v1325, 5.0
        %v1334 = vmul.f32 %v1326, 5.0
        %v1335 = vmul.f32 %v1327, 5.0
        %v1336 = vmul.f32 %v1328, 5.0
        %v1337 = vmul.f32 %v1329, 5.0
        %v1338 = vmul.f32 %v1330, 1.442695
        %v1339 = vpow.pop %v1338
        %v1340 = vmul.f32 %v1331, 1.442695
        %v1341 = vpow.pop %v1340
        %v1342 = vmul.f32 %v1332, 1.442695
        %v1343 = vpow.pop %v1342
        %v1344 = vmul.f32 %v1333, 1.442695
        %v1345 = vpow.pop %v1344
        %v1346 = vmul.f32 %v1334, 1.442695
        %v1347 = vpow.pop %v1346
        %v1348 = vmul.f32 %v1335, 1.442695
        %v1349 = vpow.pop %v1348
        %v1350 = vmul.f32 %v1336, 1.442695
        %v1351 = vpow.pop %v1350
        %v1352 = vmul.f32 %v1337, 1.442695
        %v1353 = vpow.pop %v1352
        %v1354 = vadd.f32 %v1274, %v1339
        %v1355 = vadd.f32 %v1275, %v1341
        %v1356 = vadd.f32 %v1276, %v1343
        %v1357 = vadd.f32 %v1277, %v1345
        %v1358 = vadd.f32 %v1278, %v1347
        %v1359 = vadd.f32 %v1279, %v1349
        %v1360 = vadd.f32 %v1280, %v1351
        %v1361 = vadd.f32 %v1281, %v1353
        %v1362 = vsub.f32 %v407, %v850
        %v1363 = vsub.f32 %v408, %v851
        %v1364 = vsub.f32 %v409, %v852
        %v1365 = vsub.f32 %v410, %v853
        %v1366 = vsub.f32 %v411, %v854
        %v1367 = vsub.f32 %v412, %v855
        %v1368 = vsub.f32 %v413, %v856
        %v1369 = vsub.f32 %v414, %v857
        %v1370 = vmul.f32 %v1362, 5.0
        %v1371 = vmul.f32 %v1363, 5.0
        %v1372 = vmul.f32 %v1364, 5.0
        %v1373 = vmul.f32 %v1365, 5.0
        %v1374 = vmul.f32 %v1366, 5.0
        %v1375 = vmul.f32 %v1367, 5.0
        %v1376 = vmul.f32 %v1368, 5.0
        %v1377 = vmul.f32 %v1369, 5.0
        %v1378 = vmul.f32 %v1370, 1.442695
        %v1379 = vpow.pop %v1378
        %v1380 = vmul.f32 %v1371, 1.442695
        %v1381 = vpow.pop %v1380
        %v1382 = vmul.f32 %v1372, 1.442695
        %v1383 = vpow.pop %v1382
        %v1384 = vmul.f32 %v1373, 1.442695
        %v1385 = vpow.pop %v1384
        %v1386 = vmul.f32 %v1374, 1.442695
        %v1387 = vpow.pop %v1386
        %v1388 = vmul.f32 %v1375, 1.442695
        %v1389 = vpow.pop %v1388
        %v1390 = vmul.f32 %v1376, 1.442695
        %v1391 = vpow.pop %v1390
        %v1392 = vmul.f32 %v1377, 1.442695
        %v1393 = vpow.pop %v1392
        %v1394 = vadd.f32 %v1314, %v1379
        %v1395 = vadd.f32 %v1315, %v1381
        %v1396 = vadd.f32 %v1316, %v1383
        %v1397 = vadd.f32 %v1317, %v1385
        %v1398 = vadd.f32 %v1318, %v1387
        %v1399 = vadd.f32 %v1319, %v1389
        %v1400 = vadd.f32 %v1320, %v1391
        %v1401 = vadd.f32 %v1321, %v1393
        %v1402 = vsub.f32 %v858, %v407
        %v1403 = vsub.f32 %v859, %v408
        %v1404 = vsub.f32 %v860, %v409
        %v1405 = vsub.f32 %v861, %v410
        %v1406 = vsub.f32 %v862, %v411
        %v1407 = vsub.f32 %v863, %v412
        %v1408 = vsub.f32 %v864, %v413
        %v1409 = vsub.f32 %v865, %v414
        %v1410 = vmul.f32 %v1402, 5.0
        %v1411 = vmul.f32 %v1403, 5.0
        %v1412 = vmul.f32 %v1404, 5.0
        %v1413 = vmul.f32 %v1405, 5.0
        %v1414 = vmul.f32 %v1406, 5.0
        %v1415 = vmul.f32 %v1407, 5.0
        %v1416 = vmul.f32 %v1408, 5.0
        %v1417 = vmul.f32 %v1409, 5.0
        %v1418 = vmul.f32 %v1410, 1.442695
        %v1419 = vpow.pop %v1418
        %v1420 = vmul.f32 %v1411, 1.442695
        %v1421 = vpow.pop %v1420
        %v1422 = vmul.f32 %v1412, 1.442695
        %v1423 = vpow.pop %v1422
        %v1424 = vmul.f32 %v1413, 1.442695
        %v1425 = vpow.pop %v1424
        %v1426 = vmul.f32 %v1414, 1.442695
        %v1427 = vpow.pop %v1426
        %v1428 = vmul.f32 %v1415, 1.442695
        %v1429 = vpow.pop %v1428
        %v1430 = vmul.f32 %v1416, 1.442695
        %v1431 = vpow.pop %v1430
        %v1432 = vmul.f32 %v1417, 1.442695
        %v1433 = vpow.pop %v1432
        %v1434 = vadd.f32 %v1354, %v1419
        %v1435 = vadd.f32 %v1355, %v1421
        %v1436 = vadd.f32 %v1356, %v1423
        %v1437 = vadd.f32 %v1357, %v1425
        %v1438 = vadd.f32 %v1358, %v1427
        %v1439 = vadd.f32 %v1359, %v1429
        %v1440 = vadd.f32 %v1360, %v1431
        %v1441 = vadd.f32 %v1361, %v1433
        %v1442 = vsub.f32 %v528, %v850
        %v1443 = vsub.f32 %v529, %v851
        %v1444 = vsub.f32 %v530, %v852
        %v1445 = vsub.f32 %v531, %v853
        %v1446 = vsub.f32 %v532, %v854
        %v1447 = vsub.f32 %v533, %v855
        %v1448 = vsub.f32 %v534, %v856
        %v1449 = vsub.f32 %v535, %v857
        %v1450 = vmul.f32 %v1442, 5.0
        %v1451 = vmul.f32 %v1443, 5.0
        %v1452 = vmul.f32 %v1444, 5.0
        %v1453 = vmul.f32 %v1445, 5.0
        %v1454 = vmul.f32 %v1446, 5.0
        %v1455 = vmul.f32 %v1447, 5.0
        %v1456 = vmul.f32 %v1448, 5.0
        %v1457 = vmul.f32 %v1449, 5.0
        %v1458 = vmul.f32 %v1450, 1.442695
        %v1459 = vpow.pop %v1458
        %v1460 = vmul.f32 %v1451, 1.442695
        %v1461 = vpow.pop %v1460
        %v1462 = vmul.f32 %v1452, 1.442695
        %v1463 = vpow.pop %v1462
        %v1464 = vmul.f32 %v1453, 1.442695
        %v1465 = vpow.pop %v1464
        %v1466 = vmul.f32 %v1454, 1.442695
        %v1467 = vpow.pop %v1466
        %v1468 = vmul.f32 %v1455, 1.442695
        %v1469 = vpow.pop %v1468
        %v1470 = vmul.f32 %v1456, 1.442695
        %v1471 = vpow.pop %v1470
        %v1472 = vmul.f32 %v1457, 1.442695
        %v1473 = vpow.pop %v1472
        %v1474 = vadd.f32 %v1394, %v1459
        %v1475 = vadd.f32 %v1395, %v1461
        %v1476 = vadd.f32 %v1396, %v1463
        %v1477 = vadd.f32 %v1397, %v1465
        %v1478 = vadd.f32 %v1398, %v1467
        %v1479 = vadd.f32 %v1399, %v1469
        %v1480 = vadd.f32 %v1400, %v1471
        %v1481 = vadd.f32 %v1401, %v1473
        %v1482 = vsub.f32 %v858, %v528
        %v1483 = vsub.f32 %v859, %v529
        %v1484 = vsub.f32 %v860, %v530
        %v1485 = vsub.f32 %v861, %v531
        %v1486 = vsub.f32 %v862, %v532
        %v1487 = vsub.f32 %v863, %v533
        %v1488 = vsub.f32 %v864, %v534
        %v1489 = vsub.f32 %v865, %v535
        %v1490 = vmul.f32 %v1482, 5.0
        %v1491 = vmul.f32 %v1483, 5.0
        %v1492 = vmul.f32 %v1484, 5.0
        %v1493 = vmul.f32 %v1485, 5.0
        %v1494 = vmul.f32 %v1486, 5.0
        %v1495 = vmul.f32 %v1487, 5.0
        %v1496 = vmul.f32 %v1488, 5.0
        %v1497 = vmul.f32 %v1489, 5.0
        %v1498 = vmul.f32 %v1490, 1.442695
        %v1499 = vpow.pop %v1498
        %v1500 = vmul.f32 %v1491, 1.442695
        %v1501 = vpow.pop %v1500
        %v1502 = vmul.f32 %v1492, 1.442695
        %v1503 = vpow.pop %v1502
        %v1504 = vmul.f32 %v1493, 1.442695
        %v1505 = vpow.pop %v1504
        %v1506 = vmul.f32 %v1494, 1.442695
        %v1507 = vpow.pop %v1506
        %v1508 = vmul.f32 %v1495, 1.442695
        %v1509 = vpow.pop %v1508
        %v1510 = vmul.f32 %v1496, 1.442695
        %v1511 = vpow.pop %v1510
        %v1512 = vmul.f32 %v1497, 1.442695
        %v1513 = vpow.pop %v1512
        %v1514 = vadd.f32 %v1434, %v1499
        %v1515 = vadd.f32 %v1435, %v1501
        %v1516 = vadd.f32 %v1436, %v1503
        %v1517 = vadd.f32 %v1437, %v1505
        %v1518 = vadd.f32 %v1438, %v1507
        %v1519 = vadd.f32 %v1439, %v1509
        %v1520 = vadd.f32 %v1440, %v1511
        %v1521 = vadd.f32 %v1441, %v1513
        %v1522 = vsub.f32 %v673, %v850
        %v1523 = vsub.f32 %v674, %v851
        %v1524 = vsub.f32 %v675, %v852
        %v1525 = vsub.f32 %v676, %v853
        %v1526 = vsub.f32 %v677, %v854
        %v1527 = vsub.f32 %v678, %v855
        %v1528 = vsub.f32 %v679, %v856
        %v1529 = vsub.f32 %v680, %v857
        %v1530 = vmul.f32 %v1522, 5.0
        %v1531 = vmul.f32 %v1523, 5.0
        %v1532 = vmul.f32 %v1524, 5.0
        %v1533 = vmul.f32 %v1525, 5.0
        %v1534 = vmul.f32 %v1526, 5.0
        %v1535 = vmul.f32 %v1527, 5.0
        %v1536 = vmul.f32 %v1528, 5.0
        %v1537 = vmul.f32 %v1529, 5.0
        %v1538 = vmul.f32 %v1530, 1.442695
        %v1539 = vpow.pop %v1538
        %v1540 = vmul.f32 %v1531, 1.442695
        %v1541 = vpow.pop %v1540
        %v1542 = vmul.f32 %v1532, 1.442695
        %v1543 = vpow.pop %v1542
        %v1544 = vmul.f32 %v1533, 1.442695
        %v1545 = vpow.pop %v1544
        %v1546 = vmul.f32 %v1534, 1.442695
        %v1547 = vpow.pop %v1546
        %v1548 = vmul.f32 %v1535, 1.442695
        %v1549 = vpow.pop %v1548
        %v1550 = vmul.f32 %v1536, 1.442695
        %v1551 = vpow.pop %v1550
        %v1552 = vmul.f32 %v1537, 1.442695
        %v1553 = vpow.pop %v1552
        %v1554 = vadd.f32 %v1474, %v1539
        %v1555 = vadd.f32 %v1475, %v1541
        %v1556 = vadd.f32 %v1476, %v1543
        %v1557 = vadd.f32 %v1477, %v1545
        %v1558 = vadd.f32 %v1478, %v1547
        %v1559 = vadd.f32 %v1479, %v1549
        %v1560 = vadd.f32 %v1480, %v1551
        %v1561 = vadd.f32 %v1481, %v1553
        %v1562 = vsub.f32 %v858, %v673
        %v1563 = vsub.f32 %v859, %v674
        %v1564 = vsub.f32 %v860, %v675
        %v1565 = vsub.f32 %v861, %v676
        %v1566 = vsub.f32 %v862, %v677
        %v1567 = vsub.f32 %v863, %v678
        %v1568 = vsub.f32 %v864, %v679
        %v1569 = vsub.f32 %v865, %v680
        %v1570 = vmul.f32 %v1562, 5.0
        %v1571 = vmul.f32 %v1563, 5.0
        %v1572 = vmul.f32 %v1564, 5.0
        %v1573 = vmul.f32 %v1565, 5.0
        %v1574 = vmul.f32 %v1566, 5.0
        %v1575 = vmul.f32 %v1567, 5.0
        %v1576 = vmul.f32 %v1568, 5.0
        %v1577 = vmul.f32 %v1569, 5.0
        %v1578 = vmul.f32 %v1570, 1.442695
        %v1579 = vpow.pop %v1578
        %v1580 = vmul.f32 %v1571, 1.442695
        %v1581 = vpow.pop %v1580
        %v1582 = vmul.f32 %v1572, 1.442695
        %v1583 = vpow.pop %v1582
        %v1584 = vmul.f32 %v1573, 1.442695
        %v1585 = vpow.pop %v1584
        %v1586 = vmul.f32 %v1574, 1.442695
        %v1587 = vpow.pop %v1586
        %v1588 = vmul.f32 %v1575, 1.442695
        %v1589 = vpow.pop %v1588
        %v1590 = vmul.f32 %v1576, 1.442695
        %v1591 = vpow.pop %v1590
        %v1592 = vmul.f32 %v1577, 1.442695
        %v1593 = vpow.pop %v1592
        %v1594 = vadd.f32 %v1514, %v1579
        %v1595 = vadd.f32 %v1515, %v1581
        %v1596 = vadd.f32 %v1516, %v1583
        %v1597 = vadd.f32 %v1517, %v1585
        %v1598 = vadd.f32 %v1518, %v1587
        %v1599 = vadd.f32 %v1519, %v1589
        %v1600 = vadd.f32 %v1520, %v1591
        %v1601 = vadd.f32 %v1521, %v1593
        %v1602 = vsub.f32 %v842, %v850
        %v1603 = vsub.f32 %v843, %v851
        %v1604 = vsub.f32 %v844, %v852
        %v1605 = vsub.f32 %v845, %v853
        %v1606 = vsub.f32 %v846, %v854
        %v1607 = vsub.f32 %v847, %v855
        %v1608 = vsub.f32 %v848, %v856
        %v1609 = vsub.f32 %v849, %v857
        %v1610 = vmul.f32 %v1602, 5.0
        %v1611 = vmul.f32 %v1603, 5.0
        %v1612 = vmul.f32 %v1604, 5.0
        %v1613 = vmul.f32 %v1605, 5.0
        %v1614 = vmul.f32 %v1606, 5.0
        %v1615 = vmul.f32 %v1607, 5.0
        %v1616 = vmul.f32 %v1608, 5.0
        %v1617 = vmul.f32 %v1609, 5.0
        %v1618 = vmul.f32 %v1610, 1.442695
        %v1619 = vpow.pop %v1618
        %v1620 = vmul.f32 %v1611, 1.442695
        %v1621 = vpow.pop %v1620
        %v1622 = vmul.f32 %v1612, 1.442695
        %v1623 = vpow.pop %v1622
        %v1624 = vmul.f32 %v1613, 1.442695
        %v1625 = vpow.pop %v1624
        %v1626 = vmul.f32 %v1614, 1.442695
        %v1627 = vpow.pop %v1626
        %v1628 = vmul.f32 %v1615, 1.442695
        %v1629 = vpow.pop %v1628
        %v1630 = vmul.f32 %v1616, 1.442695
        %v1631 = vpow.pop %v1630
        %v1632 = vmul.f32 %v1617, 1.442695
        %v1633 = vpow.pop %v1632
        %v1634 = vadd.f32 %v1554, %v1619
        %v1635 = vadd.f32 %v1555, %v1621
        %v1636 = vadd.f32 %v1556, %v1623
        %v1637 = vadd.f32 %v1557, %v1625
        %v1638 = vadd.f32 %v1558, %v1627
        %v1639 = vadd.f32 %v1559, %v1629
        %v1640 = vadd.f32 %v1560, %v1631
        %v1641 = vadd.f32 %v1561, %v1633
        %v1642 = vsub.f32 %v858, %v842
        %v1643 = vsub.f32 %v859, %v843
        %v1644 = vsub.f32 %v860, %v844
        %v1645 = vsub.f32 %v861, %v845
        %v1646 = vsub.f32 %v862, %v846
        %v1647 = vsub.f32 %v863, %v847
        %v1648 = vsub.f32 %v864, %v848
        %v1649 = vsub.f32 %v865, %v849
        %v1650 = vmul.f32 %v1642, 5.0
        %v1651 = vmul.f32 %v1643, 5.0
        %v1652 = vmul.f32 %v1644, 5.0
        %v1653 = vmul.f32 %v1645, 5.0
        %v1654 = vmul.f32 %v1646, 5.0
        %v1655 = vmul.f32 %v1647, 5.0
        %v1656 = vmul.f32 %v1648, 5.0
        %v1657 = vmul.f32 %v1649, 5.0
        %v1658 = vmul.f32 %v1650, 1.442695
        %v1659 = vpow.pop %v1658
        %v1660 = vmul.f32 %v1651, 1.442695
        %v1661 = vpow.pop %v1660
        %v1662 = vmul.f32 %v1652, 1.442695
        %v1663 = vpow.pop %v1662
        %v1664 = vmul.f32 %v1653, 1.442695
        %v1665 = vpow.pop %v1664
        %v1666 = vmul.f32 %v1654, 1.442695
        %v1667 = vpow.pop %v1666
        %v1668 = vmul.f32 %v1655, 1.442695
        %v1669 = vpow.pop %v1668
        %v1670 = vmul.f32 %v1656, 1.442695
        %v1671 = vpow.pop %v1670
        %v1672 = vmul.f32 %v1657, 1.442695
        %v1673 = vpow.pop %v1672
        %v1674 = vadd.f32 %v1594, %v1659
        %v1675 = vadd.f32 %v1595, %v1661
        %v1676 = vadd.f32 %v1596, %v1663
        %v1677 = vadd.f32 %v1597, %v1665
        %v1678 = vadd.f32 %v1598, %v1667
        %v1679 = vadd.f32 %v1599, %v1669
        %v1680 = vadd.f32 %v1600, %v1671
        %v1681 = vadd.f32 %v1601, %v1673
        %v1682 = vsub.f32 %v850, %v858
        %v1683 = vsub.f32 %v851, %v859
        %v1684 = vsub.f32 %v852, %v860
        %v1685 = vsub.f32 %v853, %v861
        %v1686 = vsub.f32 %v854, %v862
        %v1687 = vsub.f32 %v855, %v863
        %v1688 = vsub.f32 %v856, %v864
        %v1689 = vsub.f32 %v857, %v865
        %v1690 = vlog2.pop %v1634
        %v1691 = vmul.f32 %v1690, 0.6931472
        %v1692 = vlog2.pop %v1635
        %v1693 = vmul.f32 %v1692, 0.6931472
        %v1694 = vlog2.pop %v1636
        %v1695 = vmul.f32 %v1694, 0.6931472
        %v1696 = vlog2.pop %v1637
        %v1697 = vmul.f32 %v1696, 0.6931472
        %v1698 = vlog2.pop %v1638
        %v1699 = vmul.f32 %v1698, 0.6931472
        %v1700 = vlog2.pop %v1639
        %v1701 = vmul.f32 %v1700, 0.6931472
        %v1702 = vlog2.pop %v1640
        %v1703 = vmul.f32 %v1702, 0.6931472
        %v1704 = vlog2.pop %v1641
        %v1705 = vmul.f32 %v1704, 0.6931472
        %v1706 = vlog2.pop %v1674
        %v1707 = vmul.f32 %v1706, 0.6931472
        %v1708 = vlog2.pop %v1675
        %v1709 = vmul.f32 %v1708, 0.6931472
        %v1710 = vlog2.pop %v1676
        %v1711 = vmul.f32 %v1710, 0.6931472
        %v1712 = vlog2.pop %v1677
        %v1713 = vmul.f32 %v1712, 0.6931472
        %v1714 = vlog2.pop %v1678
        %v1715 = vmul.f32 %v1714, 0.6931472
        %v1716 = vlog2.pop %v1679
        %v1717 = vmul.f32 %v1716, 0.6931472
        %v1718 = vlog2.pop %v1680
        %v1719 = vmul.f32 %v1718, 0.6931472
        %v1720 = vlog2.pop %v1681
        %v1721 = vmul.f32 %v1720, 0.6931472
        %v1722 = vadd.f32 %v1691, %v1707
        %v1723 = vadd.f32 %v1693, %v1709
        %v1724 = vadd.f32 %v1695, %v1711
        %v1725 = vadd.f32 %v1697, %v1713
        %v1726 = vadd.f32 %v1699, %v1715
        %v1727 = vadd.f32 %v1701, %v1717
        %v1728 = vadd.f32 %v1703, %v1719
        %v1729 = vadd.f32 %v1705, %v1721
        %v1730 = vmul.f32 %v1722, 0.2
        %v1731 = vmul.f32 %v1723, 0.2
        %v1732 = vmul.f32 %v1724, 0.2
        %v1733 = vmul.f32 %v1725, 0.2
        %v1734 = vmul.f32 %v1726, 0.2
        %v1735 = vmul.f32 %v1727, 0.2
        %v1736 = vmul.f32 %v1728, 0.2
        %v1737 = vmul.f32 %v1729, 0.2
        %v1738 = vadd.f32 %v1682, %v1730
        %v1739 = vadd.f32 %v1683, %v1731
        %v1740 = vadd.f32 %v1684, %v1732
        %v1741 = vadd.f32 %v1685, %v1733
        %v1742 = vadd.f32 %v1686, %v1734
        %v1743 = vadd.f32 %v1687, %v1735
        %v1744 = vadd.f32 %v1688, %v1736
        %v1745 = vadd.f32 %v1689, %v1737
        %v1746 = vld [vmem:[#allocation5] sm:$0xff]
        %v1747 = vld [vmem:[#allocation5 + $0x8] sm:$0xff]
        %v1748 = vld [vmem:[#allocation5 + $0x10] sm:$0xff]
        %v1749 = vld [vmem:[#allocation5 + $0x18] sm:$0xff]
        %v1750 = vld [vmem:[#allocation5 + $0x20] sm:$0xff]
        %v1751 = vld [vmem:[#allocation5 + $0x28] sm:$0xff]
        %v1752 = vld [vmem:[#allocation5 + $0x30] sm:$0xff]
        %v1753 = vld [vmem:[#allocation5 + $0x38] sm:$0xff]
        %1755 = vset.pattern.permute.xlu0 0
        %1756 = vperm.xlu0 %1755, %v1750
        %v1757 = vpop.permute.xlu0 %1756
        %1760 = vset.pattern.permute.xlu0 0
        %1761 = vperm.xlu0 %1760, %v1751
        %v1762 = vpop.permute.xlu0 %1761
        %1765 = vset.pattern.permute.xlu0 0
        %1766 = vperm.xlu0 %1765, %v1752
        %v1767 = vpop.permute.xlu0 %1766
        %1770 = vset.pattern.permute.xlu0 0
        %1771 = vperm.xlu0 %1770, %v1753
        %v1772 = vpop.permute.xlu0 %1771
        %vm1774 = vcmask 261120
        %v1776 = vsel %vm1774, %v1746, 0
        %v1779 = vsel %vm1774, %v1747, 0
        %v1782 = vsel %vm1774, %v1748, 0
        %v1785 = vsel %vm1774, %v1749, 0
        %1787 = vmatprep.subr.mxu0 %v1739
        %1788 = vmatpush1.msra.mxu0 %v1738
        %1789 = vmatprep.subr.mxu0 %v1743
        %1790 = vmatpush1.msra.mxu0 %v1742
        %1791 = vmatprep.subr.mxu0 %v1035
        %1792 = vmatpush1.msra.mxu0 %v1034
        %1793 = vmatprep.subr.mxu0 %v1039
        %1794 = vmatpush1.msra.mxu0 %v1038
        %1795 = vmatprep.subr.mxu0 0.0
        %1796 = vmatpush1.msra.mxu0 0.0
        %1797 = vmatprep.subr.mxu0 0.0
        %1798 = vmatpush1.msra.mxu0 0.0
        %1799 = vmatprep.subr.mxu0 0.0
        %1800 = vmatpush1.msra.mxu0 0.0
        %1801 = vmatprep.subr.mxu0 0.0
        %1802 = vmatpush1.msra.mxu0 0.0
        %1803 = vmatprep.subr.mxu0 0.0
        %1804 = vmatpush1.msra.mxu0 0.0
        %1805 = vmatprep.subr.mxu0 0.0
        %1806 = vmatpush1.msra.mxu0 0.0
        %1807 = vmatprep.subr.mxu0 0.0
        %1808 = vmatpush1.msra.mxu0 0.0
        %1809 = vmatprep.subr.mxu0 0.0
        %1810 = vmatpush1.msra.mxu0 0.0
        %1811 = vmatprep.subr.mxu0 0.0
        %1812 = vmatpush1.msra.mxu0 0.0
        %1813 = vmatprep.subr.mxu0 0.0
        %1814 = vmatpush1.msra.mxu0 0.0
        %1815 = vmatprep.subr.mxu0 0.0
        %1816 = vmatpush1.msra.mxu0 0.0
        %1817 = vmatprep.subr.mxu0 0.0
        %1818 = vmatpush1.msra.mxu0 0.0
        %1819 = vmatprep.subr.mxu0 0.0
        %1820 = vmatpush1.msra.mxu0 0.0
        %1821 = vmatprep.subr.mxu0 0.0
        %1822 = vmatpush1.msra.mxu0 0.0
        %1823 = vmatprep.subr.mxu0 0.0
        %1824 = vmatpush1.msra.mxu0 0.0
        %1825 = vmatprep.subr.mxu0 0.0
        %1826 = vmatpush1.msra.mxu0 0.0
        %1827 = vmatprep.subr.mxu0 0.0
        %1828 = vmatpush1.msra.mxu0 0.0
        %1829 = vmatprep.subr.mxu0 0.0
        %1830 = vmatpush1.msra.mxu0 0.0
        %1831 = vmatprep.subr.mxu0 0.0
        %1832 = vmatpush1.msra.mxu0 0.0
        %1833 = vmatprep.subr.mxu0 0.0
        %1834 = vmatpush1.msra.mxu0 0.0
        %1835 = vmatprep.subr.mxu0 0.0
        %1836 = vmatpush1.msra.mxu0 0.0
        %1837 = vmatprep.subr.mxu0 0.0
        %1838 = vmatpush1.msra.mxu0 0.0
        %1839 = vmatprep.subr.mxu0 0.0
        %1840 = vmatpush1.msra.mxu0 0.0
        %1841 = vmatprep.subr.mxu0 0.0
        %1842 = vmatpush1.msra.mxu0 0.0
        %1843 = vmatprep.subr.mxu0 0.0
        %1844 = vmatpush1.msra.mxu0 0.0
        %1845 = vmatprep.subr.mxu0 0.0
        %1846 = vmatpush1.msra.mxu0 0.0
        %1847 = vmatprep.subr.mxu0 0.0
        %1848 = vmatpush1.msra.mxu0 0.0
        %1849 = vmatprep.subr.mxu0 0.0
        %1850 = vmatpush1.msra.mxu0 0.0
        %1851 = vmatprep.mubr.f32.mxu0 0.0
        %1852 = vmatmul.mubr.f32.gmra.mrb[0].mxu0 %v1776
        %v1853 = vpop.f32.mrb[0].mxu0
        %v1854 = vadd.f32 %v1757, %v1853
        %v1855 = vpop.f32.mrb[0].mxu0
        %v1856 = vadd.f32 %v1757, %v1855
        %1857 = vmatprep.mubr.f32.mxu0 0.0
        %1858 = vmatmul.mubr.f32.gmra.mrb[0].mxu0 %v1779
        %v1859 = vpop.f32.mrb[0].mxu0
        %v1860 = vadd.f32 %v1762, %v1859
        %v1861 = vpop.f32.mrb[0].mxu0
        %v1862 = vadd.f32 %v1762, %v1861
        %1863 = vmatprep.mubr.f32.mxu0 0.0
        %1864 = vmatmul.mubr.f32.gmra.mrb[0].mxu0 %v1782
        %v1865 = vpop.f32.mrb[0].mxu0
        %v1866 = vadd.f32 %v1767, %v1865
        %v1867 = vpop.f32.mrb[0].mxu0
        %v1868 = vadd.f32 %v1767, %v1867
        %1869 = vmatprep.mubr.f32.mxu0 0.0
        %1870 = vmatmul.mubr.f32.gmra.mrb[0].mxu0 %v1785
        %v1871 = vpop.f32.mrb[0].mxu0
        %v1872 = vadd.f32 %v1772, %v1871
        %v1873 = vpop.f32.mrb[0].mxu0
        %v1874 = vadd.f32 %v1772, %v1873
        %1875 = vdwg.mxu0
        %1876 = vmatprep.subr.mxu0 %v1741
        %1877 = vmatpush1.msra.mxu0 %v1740
        %1878 = vmatprep.subr.mxu0 %v1745
        %1879 = vmatpush1.msra.mxu0 %v1744
        %1880 = vmatprep.subr.mxu0 %v1037
        %1881 = vmatpush1.msra.mxu0 %v1036
        %1882 = vmatprep.subr.mxu0 %v1041
        %1883 = vmatpush1.msra.mxu0 %v1040
        %1884 = vmatprep.subr.mxu0 0.0
        %1885 = vmatpush1.msra.mxu0 0.0
        %1886 = vmatprep.subr.mxu0 0.0
        %1887 = vmatpush1.msra.mxu0 0.0
        %1888 = vmatprep.subr.mxu0 0.0
        %1889 = vmatpush1.msra.mxu0 0.0
        %1890 = vmatprep.subr.mxu0 0.0
        %1891 = vmatpush1.msra.mxu0 0.0
        %1892 = vmatprep.subr.mxu0 0.0
        %1893 = vmatpush1.msra.mxu0 0.0
        %1894 = vmatprep.subr.mxu0 0.0
        %1895 = vmatpush1.msra.mxu0 0.0
        %1896 = vmatprep.subr.mxu0 0.0
        %1897 = vmatpush1.msra.mxu0 0.0
        %1898 = vmatprep.subr.mxu0 0.0
        %1899 = vmatpush1.msra.mxu0 0.0
        %1900 = vmatprep.subr.mxu0 0.0
        %1901 = vmatpush1.msra.mxu0 0.0
        %1902 = vmatprep.subr.mxu0 0.0
        %1903 = vmatpush1.msra.mxu0 0.0
        %1904 = vmatprep.subr.mxu0 0.0
        %1905 = vmatpush1.msra.mxu0 0.0
        %1906 = vmatprep.subr.mxu0 0.0
        %1907 = vmatpush1.msra.mxu0 0.0
        %1908 = vmatprep.subr.mxu0 0.0
        %1909 = vmatpush1.msra.mxu0 0.0
        %1910 = vmatprep.subr.mxu0 0.0
        %1911 = vmatpush1.msra.mxu0 0.0
        %1912 = vmatprep.subr.mxu0 0.0
        %1913 = vmatpush1.msra.mxu0 0.0
        %1914 = vmatprep.subr.mxu0 0.0
        %1915 = vmatpush1.msra.mxu0 0.0
        %1916 = vmatprep.subr.mxu0 0.0
        %1917 = vmatpush1.msra.mxu0 0.0
        %1918 = vmatprep.subr.mxu0 0.0
        %1919 = vmatpush1.msra.mxu0 0.0
        %1920 = vmatprep.subr.mxu0 0.0
        %1921 = vmatpush1.msra.mxu0 0.0
        %1922 = vmatprep.subr.mxu0 0.0
        %1923 = vmatpush1.msra.mxu0 0.0
        %1924 = vmatprep.subr.mxu0 0.0
        %1925 = vmatpush1.msra.mxu0 0.0
        %1926 = vmatprep.subr.mxu0 0.0
        %1927 = vmatpush1.msra.mxu0 0.0
        %1928 = vmatprep.subr.mxu0 0.0
        %1929 = vmatpush1.msra.mxu0 0.0
        %1930 = vmatprep.subr.mxu0 0.0
        %1931 = vmatpush1.msra.mxu0 0.0
        %1932 = vmatprep.subr.mxu0 0.0
        %1933 = vmatpush1.msra.mxu0 0.0
        %1934 = vmatprep.subr.mxu0 0.0
        %1935 = vmatpush1.msra.mxu0 0.0
        %1936 = vmatprep.subr.mxu0 0.0
        %1937 = vmatpush1.msra.mxu0 0.0
        %1938 = vmatprep.subr.mxu0 0.0
        %1939 = vmatpush1.msra.mxu0 0.0
        %1940 = vmatprep.mubr.f32.mxu0 0.0
        %1941 = vmatmul.mubr.f32.gmra.mrb[0].mxu0 %v1776
        %v1942 = vpop.f32.mrb[0].mxu0
        %v1943 = vadd.f32 %v1757, %v1942
        %v1944 = vpop.f32.mrb[0].mxu0
        %v1945 = vadd.f32 %v1757, %v1944
        %1946 = vmatprep.mubr.f32.mxu0 0.0
        %1947 = vmatmul.mubr.f32.gmra.mrb[0].mxu0 %v1779
        %v1948 = vpop.f32.mrb[0].mxu0
        %v1949 = vadd.f32 %v1762, %v1948
        %v1950 = vpop.f32.mrb[0].mxu0
        %v1951 = vadd.f32 %v1762, %v1950
        %1952 = vmatprep.mubr.f32.mxu0 0.0
        %1953 = vmatmul.mubr.f32.gmra.mrb[0].mxu0 %v1782
        %v1954 = vpop.f32.mrb[0].mxu0
        %v1955 = vadd.f32 %v1767, %v1954
        %v1956 = vpop.f32.mrb[0].mxu0
        %v1957 = vadd.f32 %v1767, %v1956
        %1958 = vmatprep.mubr.f32.mxu0 0.0
        %1959 = vmatmul.mubr.f32.gmra.mrb[0].mxu0 %v1785
        %v1960 = vpop.f32.mrb[0].mxu0
        %v1961 = vadd.f32 %v1772, %v1960
        %v1962 = vpop.f32.mrb[0].mxu0
        %v1963 = vadd.f32 %v1772, %v1962
        %1964 = vdwg.mxu0
        %v1965 = vmax.f32 %v1854, 0.0
        %v1966 = vmax.f32 %v1856, 0.0
        %v1967 = vmax.f32 %v1943, 0.0
        %v1968 = vmax.f32 %v1945, 0.0
        %v1969 = vmax.f32 %v1860, 0.0
        %v1970 = vmax.f32 %v1862, 0.0
        %v1971 = vmax.f32 %v1949, 0.0
        %v1972 = vmax.f32 %v1951, 0.0
        %v1973 = vmax.f32 %v1866, 0.0
        %v1974 = vmax.f32 %v1868, 0.0
        %v1975 = vmax.f32 %v1955, 0.0
        %v1976 = vmax.f32 %v1957, 0.0
        %v1977 = vmax.f32 %v1872, 0.0
        %v1978 = vmax.f32 %v1874, 0.0
        %v1979 = vmax.f32 %v1961, 0.0
        %v1980 = vmax.f32 %v1963, 0.0
        %1981 = vset.pattern.permute.xlu0 1
        %1982 = vperm.xlu0 %1981, %v1750
        %v1983 = vpop.permute.xlu0 %1982
        %1985 = vset.pattern.permute.xlu0 1
        %1986 = vperm.xlu0 %1985, %v1751
        %v1987 = vpop.permute.xlu0 %1986
        %1989 = vset.pattern.permute.xlu0 1
        %1990 = vperm.xlu0 %1989, %v1752
        %v1991 = vpop.permute.xlu0 %1990
        %1993 = vset.pattern.permute.xlu0 1
        %1994 = vperm.xlu0 %1993, %v1753
        %v1995 = vpop.permute.xlu0 %1994
        %v1997 = vmul.f32 %v1965, %v1983
        %v1998 = vmul.f32 %v1966, %v1983
        %v1999 = vmul.f32 %v1967, %v1983
        %v2000 = vmul.f32 %v1968, %v1983
        %v2001 = vmul.f32 %v1969, %v1987
        %v2002 = vmul.f32 %v1970, %v1987
        %v2003 = vmul.f32 %v1971, %v1987
        %v2004 = vmul.f32 %v1972, %v1987
        %v2005 = vmul.f32 %v1973, %v1991
        %v2006 = vmul.f32 %v1974, %v1991
        %v2007 = vmul.f32 %v1975, %v1991
        %v2008 = vmul.f32 %v1976, %v1991
        %v2009 = vmul.f32 %v1977, %v1995
        %v2010 = vmul.f32 %v1978, %v1995
        %v2011 = vmul.f32 %v1979, %v1995
        %v2012 = vmul.f32 %v1980, %v1995
        %2013 = vset.pattern.permute.xlu0 2
        %2014 = vperm.xlu0 %2013, %v1750
        %v2015 = vpop.permute.xlu0 %2014
        %2017 = vset.pattern.permute.xlu0 2
        %2018 = vperm.xlu0 %2017, %v1751
        %v2019 = vpop.permute.xlu0 %2018
        %2021 = vset.pattern.permute.xlu0 2
        %2022 = vperm.xlu0 %2021, %v1752
        %v2023 = vpop.permute.xlu0 %2022
        %2025 = vset.pattern.permute.xlu0 2
        %2026 = vperm.xlu0 %2025, %v1753
        %v2027 = vpop.permute.xlu0 %2026
        %v2029 = vadd.f32 %v1997, %v2015
        %v2030 = vadd.f32 %v1998, %v2015
        %v2031 = vadd.f32 %v1999, %v2015
        %v2032 = vadd.f32 %v2000, %v2015
        %v2033 = vadd.f32 %v2001, %v2019
        %v2034 = vadd.f32 %v2002, %v2019
        %v2035 = vadd.f32 %v2003, %v2019
        %v2036 = vadd.f32 %v2004, %v2019
        %v2037 = vadd.f32 %v2005, %v2023
        %v2038 = vadd.f32 %v2006, %v2023
        %v2039 = vadd.f32 %v2007, %v2023
        %v2040 = vadd.f32 %v2008, %v2023
        %v2041 = vadd.f32 %v2009, %v2027
        %v2042 = vadd.f32 %v2010, %v2027
        %v2043 = vadd.f32 %v2011, %v2027
        %v2044 = vadd.f32 %v2012, %v2027
        %v2045 = vld [vmem:[#allocation5 + $0x40] sm:$0xff]
        %v2046 = vld [vmem:[#allocation5 + $0x48] sm:$0xff]
        %v2047 = vld [vmem:[#allocation5 + $0x50] sm:$0xff]
        %v2048 = vld [vmem:[#allocation5 + $0x58] sm:$0xff]
        %2050 = vset.pattern.permute.xlu0 0
        %2051 = vperm.xlu0 %2050, %v2047
        %v2052 = vpop.permute.xlu0 %2051
        %2055 = vset.pattern.permute.xlu0 0
        %2056 = vperm.xlu0 %2055, %v2048
        %v2057 = vpop.permute.xlu0 %2056
        %v2060 = vsel %vm1774, %v2045, 0
        %v2063 = vsel %vm1774, %v2046, 0
        %2065 = vmatprep.subr.mxu0 %v2030
        %2066 = vmatpush1.msra.mxu0 %v2029
        %2067 = vmatprep.subr.mxu0 %v2034
        %2068 = vmatpush1.msra.mxu0 %v2033
        %2069 = vmatprep.subr.mxu0 %v2038
        %2070 = vmatpush1.msra.mxu0 %v2037
        %2071 = vmatprep.subr.mxu0 %v2042
        %2072 = vmatpush1.msra.mxu0 %v2041
        %2073 = vmatprep.subr.mxu0 0.0
        %2074 = vmatpush1.msra.mxu0 0.0
        %2075 = vmatprep.subr.mxu0 0.0
        %2076 = vmatpush1.msra.mxu0 0.0
        %2077 = vmatprep.subr.mxu0 0.0
        %2078 = vmatpush1.msra.mxu0 0.0
        %2079 = vmatprep.subr.mxu0 0.0
        %2080 = vmatpush1.msra.mxu0 0.0
        %2081 = vmatprep.subr.mxu0 0.0
        %2082 = vmatpush1.msra.mxu0 0.0
        %2083 = vmatprep.subr.mxu0 0.0
        %2084 = vmatpush1.msra.mxu0 0.0
        %2085 = vmatprep.subr.mxu0 0.0
        %2086 = vmatpush1.msra.mxu0 0.0
        %2087 = vmatprep.subr.mxu0 0.0
        %2088 = vmatpush1.msra.mxu0 0.0
        %2089 = vmatprep.subr.mxu0 0.0
        %2090 = vmatpush1.msra.mxu0 0.0
        %2091 = vmatprep.subr.mxu0 0.0
        %2092 = vmatpush1.msra.mxu0 0.0
        %2093 = vmatprep.subr.mxu0 0.0
        %2094 = vmatpush1.msra.mxu0 0.0
        %2095 = vmatprep.subr.mxu0 0.0
        %2096 = vmatpush1.msra.mxu0 0.0
        %2097 = vmatprep.subr.mxu0 0.0
        %2098 = vmatpush1.msra.mxu0 0.0
        %2099 = vmatprep.subr.mxu0 0.0
        %2100 = vmatpush1.msra.mxu0 0.0
        %2101 = vmatprep.subr.mxu0 0.0
        %2102 = vmatpush1.msra.mxu0 0.0
        %2103 = vmatprep.subr.mxu0 0.0
        %2104 = vmatpush1.msra.mxu0 0.0
        %2105 = vmatprep.subr.mxu0 0.0
        %2106 = vmatpush1.msra.mxu0 0.0
        %2107 = vmatprep.subr.mxu0 0.0
        %2108 = vmatpush1.msra.mxu0 0.0
        %2109 = vmatprep.subr.mxu0 0.0
        %2110 = vmatpush1.msra.mxu0 0.0
        %2111 = vmatprep.subr.mxu0 0.0
        %2112 = vmatpush1.msra.mxu0 0.0
        %2113 = vmatprep.subr.mxu0 0.0
        %2114 = vmatpush1.msra.mxu0 0.0
        %2115 = vmatprep.subr.mxu0 0.0
        %2116 = vmatpush1.msra.mxu0 0.0
        %2117 = vmatprep.subr.mxu0 0.0
        %2118 = vmatpush1.msra.mxu0 0.0
        %2119 = vmatprep.subr.mxu0 0.0
        %2120 = vmatpush1.msra.mxu0 0.0
        %2121 = vmatprep.subr.mxu0 0.0
        %2122 = vmatpush1.msra.mxu0 0.0
        %2123 = vmatprep.subr.mxu0 0.0
        %2124 = vmatpush1.msra.mxu0 0.0
        %2125 = vmatprep.subr.mxu0 0.0
        %2126 = vmatpush1.msra.mxu0 0.0
        %2127 = vmatprep.subr.mxu0 0.0
        %2128 = vmatpush1.msra.mxu0 0.0
        %2129 = vmatprep.mubr.f32.mxu0 0.0
        %2130 = vmatmul.mubr.f32.gmra.mrb[0].mxu0 %v2060
        %v2131 = vpop.f32.mrb[0].mxu0
        %v2132 = vadd.f32 %v2052, %v2131
        %v2133 = vpop.f32.mrb[0].mxu0
        %v2134 = vadd.f32 %v2052, %v2133
        %2135 = vmatprep.mubr.f32.mxu0 0.0
        %2136 = vmatmul.mubr.f32.gmra.mrb[0].mxu0 %v2063
        %v2137 = vpop.f32.mrb[0].mxu0
        %v2138 = vadd.f32 %v2057, %v2137
        %v2139 = vpop.f32.mrb[0].mxu0
        %v2140 = vadd.f32 %v2057, %v2139
        %2141 = vdwg.mxu0
        %2142 = vmatprep.subr.mxu0 %v2032
        %2143 = vmatpush1.msra.mxu0 %v2031
        %2144 = vmatprep.subr.mxu0 %v2036
        %2145 = vmatpush1.msra.mxu0 %v2035
        %2146 = vmatprep.subr.mxu0 %v2040
        %2147 = vmatpush1.msra.mxu0 %v2039
        %2148 = vmatprep.subr.mxu0 %v2044
        %2149 = vmatpush1.msra.mxu0 %v2043
        %2150 = vmatprep.subr.mxu0 0.0
        %2151 = vmatpush1.msra.mxu0 0.0
        %2152 = vmatprep.subr.mxu0 0.0
        %2153 = vmatpush1.msra.mxu0 0.0
        %2154 = vmatprep.subr.mxu0 0.0
        %2155 = vmatpush1.msra.mxu0 0.0
        %2156 = vmatprep.subr.mxu0 0.0
        %2157 = vmatpush1.msra.mxu0 0.0
        %2158 = vmatprep.subr.mxu0 0.0
        %2159 = vmatpush1.msra.mxu0 0.0
        %2160 = vmatprep.subr.mxu0 0.0
        %2161 = vmatpush1.msra.mxu0 0.0
        %2162 = vmatprep.subr.mxu0 0.0
        %2163 = vmatpush1.msra.mxu0 0.0
        %2164 = vmatprep.subr.mxu0 0.0
        %2165 = vmatpush1.msra.mxu0 0.0
        %2166 = vmatprep.subr.mxu0 0.0
        %2167 = vmatpush1.msra.mxu0 0.0
        %2168 = vmatprep.subr.mxu0 0.0
        %2169 = vmatpush1.msra.mxu0 0.0
        %2170 = vmatprep.subr.mxu0 0.0
        %2171 = vmatpush1.msra.mxu0 0.0
        %2172 = vmatprep.subr.mxu0 0.0
        %2173 = vmatpush1.msra.mxu0 0.0
        %2174 = vmatprep.subr.mxu0 0.0
        %2175 = vmatpush1.msra.mxu0 0.0
        %2176 = vmatprep.subr.mxu0 0.0
        %2177 = vmatpush1.msra.mxu0 0.0
        %2178 = vmatprep.subr.mxu0 0.0
        %2179 = vmatpush1.msra.mxu0 0.0
        %2180 = vmatprep.subr.mxu0 0.0
        %2181 = vmatpush1.msra.mxu0 0.0
        %2182 = vmatprep.subr.mxu0 0.0
        %2183 = vmatpush1.msra.mxu0 0.0
        %2184 = vmatprep.subr.mxu0 0.0
        %2185 = vmatpush1.msra.mxu0 0.0
        %2186 = vmatprep.subr.mxu0 0.0
        %2187 = vmatpush1.msra.mxu0 0.0
        %2188 = vmatprep.subr.mxu0 0.0
        %2189 = vmatpush1.msra.mxu0 0.0
        %2190 = vmatprep.subr.mxu0 0.0
        %2191 = vmatpush1.msra.mxu0 0.0
        %2192 = vmatprep.subr.mxu0 0.0
        %2193 = vmatpush1.msra.mxu0 0.0
        %2194 = vmatprep.subr.mxu0 0.0
        %2195 = vmatpush1.msra.mxu0 0.0
        %2196 = vmatprep.subr.mxu0 0.0
        %2197 = vmatpush1.msra.mxu0 0.0
        %2198 = vmatprep.subr.mxu0 0.0
        %2199 = vmatpush1.msra.mxu0 0.0
        %2200 = vmatprep.subr.mxu0 0.0
        %2201 = vmatpush1.msra.mxu0 0.0
        %2202 = vmatprep.subr.mxu0 0.0
        %2203 = vmatpush1.msra.mxu0 0.0
        %2204 = vmatprep.subr.mxu0 0.0
        %2205 = vmatpush1.msra.mxu0 0.0
        %2206 = vmatprep.mubr.f32.mxu0 0.0
        %2207 = vmatmul.mubr.f32.gmra.mrb[0].mxu0 %v2060
        %v2208 = vpop.f32.mrb[0].mxu0
        %v2209 = vadd.f32 %v2052, %v2208
        %v2210 = vpop.f32.mrb[0].mxu0
        %v2211 = vadd.f32 %v2052, %v2210
        %2212 = vmatprep.mubr.f32.mxu0 0.0
        %2213 = vmatmul.mubr.f32.gmra.mrb[0].mxu0 %v2063
        %v2214 = vpop.f32.mrb[0].mxu0
        %v2215 = vadd.f32 %v2057, %v2214
        %v2216 = vpop.f32.mrb[0].mxu0
        %v2217 = vadd.f32 %v2057, %v2216
        %2218 = vdwg.mxu0
        %v2219 = vmax.f32 %v2132, 0.0
        %v2220 = vmax.f32 %v2134, 0.0
        %v2221 = vmax.f32 %v2209, 0.0
        %v2222 = vmax.f32 %v2211, 0.0
        %v2223 = vmax.f32 %v2138, 0.0
        %v2224 = vmax.f32 %v2140, 0.0
        %v2225 = vmax.f32 %v2215, 0.0
        %v2226 = vmax.f32 %v2217, 0.0
        %2227 = vset.pattern.permute.xlu0 1
        %2228 = vperm.xlu0 %2227, %v2047
        %v2229 = vpop.permute.xlu0 %2228
        %2231 = vset.pattern.permute.xlu0 1
        %2232 = vperm.xlu0 %2231, %v2048
        %v2233 = vpop.permute.xlu0 %2232
        %v2235 = vmul.f32 %v2219, %v2229
        %v2236 = vmul.f32 %v2220, %v2229
        %v2237 = vmul.f32 %v2221, %v2229
        %v2238 = vmul.f32 %v2222, %v2229
        %v2239 = vmul.f32 %v2223, %v2233
        %v2240 = vmul.f32 %v2224, %v2233
        %v2241 = vmul.f32 %v2225, %v2233
        %v2242 = vmul.f32 %v2226, %v2233
        %2243 = vset.pattern.permute.xlu0 2
        %2244 = vperm.xlu0 %2243, %v2047
        %v2245 = vpop.permute.xlu0 %2244
        %2247 = vset.pattern.permute.xlu0 2
        %2248 = vperm.xlu0 %2247, %v2048
        %v2249 = vpop.permute.xlu0 %2248
        %v2251 = vadd.f32 %v2235, %v2245
        %v2252 = vadd.f32 %v2236, %v2245
        %v2253 = vadd.f32 %v2237, %v2245
        %v2254 = vadd.f32 %v2238, %v2245
        %v2255 = vadd.f32 %v2239, %v2249
        %v2256 = vadd.f32 %v2240, %v2249
        %v2257 = vadd.f32 %v2241, %v2249
        %v2258 = vadd.f32 %v2242, %v2249
        %v2259 = vld [vmem:[#allocation5 + $0x60] sm:$0xff]
        %v2260 = vld [vmem:[#allocation5 + $0x68] sm:$0xff]
        %2262 = vset.pattern.permute.xlu0 0
        %2263 = vperm.xlu0 %2262, %v2260
        %v2264 = vpop.permute.xlu0 %2263
        %vm2266 = vcmask 130048
        %v2268 = vsel %vm2266, %v2259, 0
        %2270 = vmatprep.subr.mxu0 %v2252
        %2271 = vmatpush1.msra.mxu0 %v2251
        %2272 = vmatprep.subr.mxu0 %v2256
        %2273 = vmatpush1.msra.mxu0 %v2255
        %2274 = vmatprep.subr.mxu0 0.0
        %2275 = vmatpush1.msra.mxu0 0.0
        %2276 = vmatprep.subr.mxu0 0.0
        %2277 = vmatpush1.msra.mxu0 0.0
        %2278 = vmatprep.subr.mxu0 0.0
        %2279 = vmatpush1.msra.mxu0 0.0
        %2280 = vmatprep.subr.mxu0 0.0
        %2281 = vmatpush1.msra.mxu0 0.0
        %2282 = vmatprep.subr.mxu0 0.0
        %2283 = vmatpush1.msra.mxu0 0.0
        %2284 = vmatprep.subr.mxu0 0.0
        %2285 = vmatpush1.msra.mxu0 0.0
        %2286 = vmatprep.subr.mxu0 0.0
        %2287 = vmatpush1.msra.mxu0 0.0
        %2288 = vmatprep.subr.mxu0 0.0
        %2289 = vmatpush1.msra.mxu0 0.0
        %2290 = vmatprep.subr.mxu0 0.0
        %2291 = vmatpush1.msra.mxu0 0.0
        %2292 = vmatprep.subr.mxu0 0.0
        %2293 = vmatpush1.msra.mxu0 0.0
        %2294 = vmatprep.subr.mxu0 0.0
        %2295 = vmatpush1.msra.mxu0 0.0
        %2296 = vmatprep.subr.mxu0 0.0
        %2297 = vmatpush1.msra.mxu0 0.0
        %2298 = vmatprep.subr.mxu0 0.0
        %2299 = vmatpush1.msra.mxu0 0.0
        %2300 = vmatprep.subr.mxu0 0.0
        %2301 = vmatpush1.msra.mxu0 0.0
        %2302 = vmatprep.subr.mxu0 0.0
        %2303 = vmatpush1.msra.mxu0 0.0
        %2304 = vmatprep.subr.mxu0 0.0
        %2305 = vmatpush1.msra.mxu0 0.0
        %2306 = vmatprep.subr.mxu0 0.0
        %2307 = vmatpush1.msra.mxu0 0.0
        %2308 = vmatprep.subr.mxu0 0.0
        %2309 = vmatpush1.msra.mxu0 0.0
        %2310 = vmatprep.subr.mxu0 0.0
        %2311 = vmatpush1.msra.mxu0 0.0
        %2312 = vmatprep.subr.mxu0 0.0
        %2313 = vmatpush1.msra.mxu0 0.0
        %2314 = vmatprep.subr.mxu0 0.0
        %2315 = vmatpush1.msra.mxu0 0.0
        %2316 = vmatprep.subr.mxu0 0.0
        %2317 = vmatpush1.msra.mxu0 0.0
        %2318 = vmatprep.subr.mxu0 0.0
        %2319 = vmatpush1.msra.mxu0 0.0
        %2320 = vmatprep.subr.mxu0 0.0
        %2321 = vmatpush1.msra.mxu0 0.0
        %2322 = vmatprep.subr.mxu0 0.0
        %2323 = vmatpush1.msra.mxu0 0.0
        %2324 = vmatprep.subr.mxu0 0.0
        %2325 = vmatpush1.msra.mxu0 0.0
        %2326 = vmatprep.subr.mxu0 0.0
        %2327 = vmatpush1.msra.mxu0 0.0
        %2328 = vmatprep.subr.mxu0 0.0
        %2329 = vmatpush1.msra.mxu0 0.0
        %2330 = vmatprep.subr.mxu0 0.0
        %2331 = vmatpush1.msra.mxu0 0.0
        %2332 = vmatprep.subr.mxu0 0.0
        %2333 = vmatpush1.msra.mxu0 0.0
        %2334 = vmatprep.mubr.f32.mxu0 0.0
        %2335 = vmatmul.mubr.f32.gmra.mrb[0].mxu0 %v2268
        %v2336 = vpop.f32.mrb[0].mxu0
        %v2337 = vadd.f32 %v2264, %v2336
        %v2338 = vpop.f32.mrb[0].mxu0
        %v2339 = vadd.f32 %v2264, %v2338
        %2340 = vdwg.mxu0
        %2341 = vmatprep.subr.mxu0 %v2254
        %2342 = vmatpush1.msra.mxu0 %v2253
        %2343 = vmatprep.subr.mxu0 %v2258
        %2344 = vmatpush1.msra.mxu0 %v2257
        %2345 = vmatprep.subr.mxu0 0.0
        %2346 = vmatpush1.msra.mxu0 0.0
        %2347 = vmatprep.subr.mxu0 0.0
        %2348 = vmatpush1.msra.mxu0 0.0
        %2349 = vmatprep.subr.mxu0 0.0
        %2350 = vmatpush1.msra.mxu0 0.0
        %2351 = vmatprep.subr.mxu0 0.0
        %2352 = vmatpush1.msra.mxu0 0.0
        %2353 = vmatprep.subr.mxu0 0.0
        %2354 = vmatpush1.msra.mxu0 0.0
        %2355 = vmatprep.subr.mxu0 0.0
        %2356 = vmatpush1.msra.mxu0 0.0
        %2357 = vmatprep.subr.mxu0 0.0
        %2358 = vmatpush1.msra.mxu0 0.0
        %2359 = vmatprep.subr.mxu0 0.0
        %2360 = vmatpush1.msra.mxu0 0.0
        %2361 = vmatprep.subr.mxu0 0.0
        %2362 = vmatpush1.msra.mxu0 0.0
        %2363 = vmatprep.subr.mxu0 0.0
        %2364 = vmatpush1.msra.mxu0 0.0
        %2365 = vmatprep.subr.mxu0 0.0
        %2366 = vmatpush1.msra.mxu0 0.0
        %2367 = vmatprep.subr.mxu0 0.0
        %2368 = vmatpush1.msra.mxu0 0.0
        %2369 = vmatprep.subr.mxu0 0.0
        %2370 = vmatpush1.msra.mxu0 0.0
        %2371 = vmatprep.subr.mxu0 0.0
        %2372 = vmatpush1.msra.mxu0 0.0
        %2373 = vmatprep.subr.mxu0 0.0
        %2374 = vmatpush1.msra.mxu0 0.0
        %2375 = vmatprep.subr.mxu0 0.0
        %2376 = vmatpush1.msra.mxu0 0.0
        %2377 = vmatprep.subr.mxu0 0.0
        %2378 = vmatpush1.msra.mxu0 0.0
        %2379 = vmatprep.subr.mxu0 0.0
        %2380 = vmatpush1.msra.mxu0 0.0
        %2381 = vmatprep.subr.mxu0 0.0
        %2382 = vmatpush1.msra.mxu0 0.0
        %2383 = vmatprep.subr.mxu0 0.0
        %2384 = vmatpush1.msra.mxu0 0.0
        %2385 = vmatprep.subr.mxu0 0.0
        %2386 = vmatpush1.msra.mxu0 0.0
        %2387 = vmatprep.subr.mxu0 0.0
        %2388 = vmatpush1.msra.mxu0 0.0
        %2389 = vmatprep.subr.mxu0 0.0
        %2390 = vmatpush1.msra.mxu0 0.0
        %2391 = vmatprep.subr.mxu0 0.0
        %2392 = vmatpush1.msra.mxu0 0.0
        %2393 = vmatprep.subr.mxu0 0.0
        %2394 = vmatpush1.msra.mxu0 0.0
        %2395 = vmatprep.subr.mxu0 0.0
        %2396 = vmatpush1.msra.mxu0 0.0
        %2397 = vmatprep.subr.mxu0 0.0
        %2398 = vmatpush1.msra.mxu0 0.0
        %2399 = vmatprep.subr.mxu0 0.0
        %2400 = vmatpush1.msra.mxu0 0.0
        %2401 = vmatprep.subr.mxu0 0.0
        %2402 = vmatpush1.msra.mxu0 0.0
        %2403 = vmatprep.subr.mxu0 0.0
        %2404 = vmatpush1.msra.mxu0 0.0
        %2405 = vmatprep.mubr.f32.mxu0 0.0
        %2406 = vmatmul.mubr.f32.gmra.mrb[0].mxu0 %v2268
        %v2407 = vpop.f32.mrb[0].mxu0
        %v2408 = vadd.f32 %v2264, %v2407
        %v2409 = vpop.f32.mrb[0].mxu0
        %v2410 = vadd.f32 %v2264, %v2409
        %2411 = vdwg.mxu0
        %2412 = vst [vmem:[%s176] sm:$0xff] %v2337
        %2413 = vst [vmem:[%s176 + $0x8] sm:$0xff] %v2339
        %2414 = vst [vmem:[%s176 + $0x10] sm:$0xff] %v2408
        %2415 = vst [vmem:[%s176 + $0x18] sm:$0xff] %v2410
        %s2416 = sand.u32 %s75, 1
        %s2417 = scalar_lea.sflag [#allocation4], %s2416
        %s2418 = sand.u32 %s75, 1
        %s2419 = smul.addr %s2418, 32
        %s2420 = scalar_lea.vmem [#allocation7], %s2419
        // Predicated region
        $region37: #{tpu_custom_call.1} parent=27 // pred_check
          %p2421 = pneg %p85
        $region38: #{tpu_custom_call.1} parent=27 // pred_check_branch
          %2423 = sbr.rel (%p2421) target = $region40
        $region39: #{tpu_custom_call.1} parent=27 // pred_region
          %s2424 = smul.u32 4, %s20
          %s2426 = ssub.s32 512, 512
          %2427 = vsyncadd %s2417, %s2426
          %s2428 = smul.addr %s2424, 128
          %s2429 = scalar_lea.hbm %s2, %s2428
          %s2431 = sshll.u32 %s2420, 4
          %s2432 = int_to_ptr.vmem [resolvable:$true] %s2431
          %2434 = dma.vmem_to_hbm [thread:$0]  %s2432, 512, %s2429, %s2417
        $region40: #{tpu_custom_call.1} parent=27 // pred_fallthru
          _
      $region28: #{tpu_custom_call.1} parent=5 // pred_fallthru
        _
      %p2435 = scmp.le.s32.totalorder 2, %s15
      // Predicated region
      $region41: #{tpu_custom_call.1} parent=5 // pred_check
        %p2436 = pneg %p2435
      $region42: #{tpu_custom_call.1} parent=5 // pred_check_branch
        %2438 = sbr.rel (%p2436) target = $region44
      $region43: #{tpu_custom_call.1} parent=5 // pred_region
        %s2439 = ssub.s32 %s15, 2
        // Predicated region
        $region45: #{tpu_custom_call.1} parent=43 // pred_check
          %p2440 = pneg %p91
        $region46: #{tpu_custom_call.1} parent=43 // pred_check_branch
          %2442 = sbr.rel (%p2440) target = $region48
        $region47: #{tpu_custom_call.1} parent=43 // pred_region
          %s2443 = sand.u32 %s76, 1
          %s2444 = scalar_lea.sflag [#allocation4], %s2443
          %s2445 = sand.u32 %s76, 1
          %s2446 = smul.addr %s2445, 32
          %s2447 = scalar_lea.vmem [#allocation7], %s2446
          %2448 = dma.done %s2444, 512
        $region48: #{tpu_custom_call.1} parent=43 // pred_fallthru
          _
      $region44: #{tpu_custom_call.1} parent=5 // pred_fallthru
        _
    $region6: #{tpu_custom_call.1} parent=1 // loop_footer
      %s19 = sadd.s32 1, %s15
    $region7: #{tpu_custom_call.1} parent=1 // loop_footer_branch
      %14 = sbr.rel target = $region3
    $region8: #{tpu_custom_call.1} parent=1 // loop_exit
      _
    %2449 = vsyncpa [#allocation3], 1
    %s2450 = scalar_lea.sflag [#allocation3], 1
    %2451 = vsyncpa %s2450, 1
    %2452 = vsyncpa [#allocation6], 1
    %2453 = vsyncpa [#allocation4], 1
    %s2454 = scalar_lea.sflag [#allocation4], 1
    %2455 = vsyncpa %s2454, 1

</llo_original>
